<compile_context>
chip_gen: v6e
topology: v6e:2x2x1
jax: 0.10.0
libtpu: 0.0.40
codegen_flags: <defaults>
</compile_context>

<pallas_src>
import functools
import math

import jax
import jax.numpy as jnp
from jax.experimental import pallas as pl
from jax.experimental.pallas import tpu as pltpu

BN_EPS = 1e-5


def _elu(x):
    # ELU(alpha=1): x if x > 0 else exp(x) - 1. Clamp the exp argument since
    # jnp.where evaluates both branches.
    return jnp.where(x > 0, x, jnp.exp(jnp.minimum(x, 0.0)) - 1.0)


# --------------------------------------------------------------------------
# Pass 1: full-batch BatchNorm statistics -> fused (scale, shift) per feature
# --------------------------------------------------------------------------
def _bn_stats_kernel(
    ctx_ref, deep_ref,
    g_prep_ref, b_prep_ref, g_deep_ref, b_deep_ref,
    sc_prep_ref, sh_prep_ref, sc_deep_ref, sh_deep_ref,
    sum_ctx, ssq_ctx, sum_deep, ssq_deep,
    *, inv_batch,
):
    i = pl.program_id(0)

    @pl.when(i == 0)
    def _init():
        sum_ctx[...] = jnp.zeros_like(sum_ctx)
        ssq_ctx[...] = jnp.zeros_like(ssq_ctx)
        sum_deep[...] = jnp.zeros_like(sum_deep)
        ssq_deep[...] = jnp.zeros_like(ssq_deep)

    ctx = ctx_ref[...].astype(jnp.float32)
    deep = deep_ref[...].astype(jnp.float32)
    sum_ctx[...] += jnp.sum(ctx, axis=0, keepdims=True)
    ssq_ctx[...] += jnp.sum(ctx * ctx, axis=0, keepdims=True)
    sum_deep[...] += jnp.sum(deep, axis=0, keepdims=True)
    ssq_deep[...] += jnp.sum(deep * deep, axis=0, keepdims=True)

    @pl.when(i == pl.num_programs(0) - 1)
    def _finalize():
        def scale_shift(s, ss, g, b):
            mean = s * inv_batch
            var = ss * inv_batch - mean * mean        # biased var (BN train mode)
            scale = g * jax.lax.rsqrt(var + BN_EPS)
            shift = b - mean * scale
            return scale, shift

        sc, sh = scale_shift(sum_ctx[...], ssq_ctx[...],
                             g_prep_ref[...], b_prep_ref[...])
        sc_prep_ref[...] = sc
        sh_prep_ref[...] = sh
        sc, sh = scale_shift(sum_deep[...], ssq_deep[...],
                             g_deep_ref[...], b_deep_ref[...])
        sc_deep_ref[...] = sc
        sh_deep_ref[...] = sh


# --------------------------------------------------------------------------
# Pass 2: apply fused BN + MLP + log-softmax (batch-tiled, pipelined)
# --------------------------------------------------------------------------
def _ensamble_apply_kernel(
    ctx_ref, deep_ref,
    sc_prep_ref, sh_prep_ref, sc_deep_ref, sh_deep_ref,
    w1_ref, b1_ref, w2_ref, b2_ref,
    wc_ctx_ref, wc_deep_ref, bc_ref,
    wo_ref, bo_ref,
    out_ref,
):
    f32 = jnp.float32

    # Fused BN (stats computed over the full batch in pass 1): x*scale + shift.
    ctx = ctx_ref[...] * sc_prep_ref[...] + sh_prep_ref[...]
    deep = deep_ref[...] * sc_deep_ref[...] + sh_deep_ref[...]

    # deep_context MLP: Linear(P*256,512) -> ELU -> Linear(512,128) -> ELU.
    # bf16 operands on the two wide GEMMs, f32 accumulation.
    h = jnp.dot(deep.astype(jnp.bfloat16), w1_ref[...],
                preferred_element_type=f32) + b1_ref[...]
    h = _elu(h)
    h = jnp.dot(h.astype(jnp.bfloat16), w2_ref[...],
                preferred_element_type=f32) + b2_ref[...]
    h = _elu(h)

    # context1: Linear(P + 128, 10) on cat([ctx, h], dim=1), done as a split
    # matmul (avoids an in-kernel concatenate). These GEMMs are tiny (N=10);
    # their cost is negligible next to the w1 GEMM.
    c = (jnp.dot(ctx, wc_ctx_ref[...], preferred_element_type=f32)
         + jnp.dot(h, wc_deep_ref[...], preferred_element_type=f32)
         + bc_ref[...])
    c = _elu(c)

    # output: Linear(10, classes) + LogSoftmax(dim=1), all f32.
    logits = jnp.dot(c, wo_ref[...], preferred_element_type=f32) + bo_ref[...]
    m = jnp.max(logits, axis=1, keepdims=True)
    z = logits - m
    lse = jnp.log(jnp.sum(jnp.exp(z), axis=1, keepdims=True))
    out_ref[...] = z - lse


def ensamble42_forward(context, deep_context, params, *, block_b=None):
    B, P = context.shape
    D = deep_context.shape[1]
    classes = params["bo"].shape[-1]
    f32 = jnp.float32

    if block_b is None:
        block_b = min(B, 256)
    assert B % block_b == 0, "batch must be divisible by block_b"
    assert block_b == B or block_b % 8 == 0, "batch tile must be a multiple of 8"
    grid = (B // block_b,)

    def const_spec(arr):
        zeros = (0,) * arr.ndim
        return pl.BlockSpec(arr.shape, lambda i, _z=zeros: _z)

    ctx_spec = pl.BlockSpec((block_b, P), lambda i: (i, 0))
    deep_spec = pl.BlockSpec((block_b, D), lambda i: (i, 0))

    # ---------------- Pass 1: BN statistics (accumulate over batch tiles) ----
    sc_prep, sh_prep, sc_deep, sh_deep = pl.pallas_call(
        functools.partial(_bn_stats_kernel, inv_batch=1.0 / B),
        out_shape=(jax.ShapeDtypeStruct((1, P), f32),
                   jax.ShapeDtypeStruct((1, P), f32),
                   jax.ShapeDtypeStruct((1, D), f32),
                   jax.ShapeDtypeStruct((1, D), f32)),
        grid=grid,
        in_specs=[ctx_spec, deep_spec,
                  const_spec(params["g_prep"]), const_spec(params["b_prep"]),
                  const_spec(params["g_deep"]), const_spec(params["b_deep"])],
        out_specs=(pl.BlockSpec((1, P), lambda i: (0, 0)),
                   pl.BlockSpec((1, P), lambda i: (0, 0)),
                   pl.BlockSpec((1, D), lambda i: (0, 0)),
                   pl.BlockSpec((1, D), lambda i: (0, 0))),
        scratch_shapes=[pltpu.VMEM((1, P), f32), pltpu.VMEM((1, P), f32),
                        pltpu.VMEM((1, D), f32), pltpu.VMEM((1, D), f32)],
        compiler_params=pltpu.CompilerParams(
            dimension_semantics=("arbitrary",)),
    )(context, deep_context,
      params["g_prep"], params["b_prep"], params["g_deep"], params["b_deep"])

    # ---------------- Pass 2: apply + MLP + log-softmax ----------------------
    weight_args = [
        sc_prep, sh_prep, sc_deep, sh_deep,
        params["w1"], params["b1"], params["w2"], params["b2"],
        params["wc_ctx"], params["wc_deep"], params["bc"],
        params["wo"], params["bo"],
    ]

    # VMEM budget: resident weights + double-buffered streaming tiles +
    # intermediate activations + headroom. Raising the scoped limit matters on
    # v5e (16 MiB default); stays well within v7x's 64 MiB physical.
    def nbytes(a):
        return int(a.size) * a.dtype.itemsize

    weight_bytes = sum(nbytes(a) for a in weight_args)
    stream_bytes = 2 * 2 * block_b * (D + P + classes) * 4   # 2 buffers, in+out
    act_bytes = 4 * block_b * (512 + 128) * 4
    est_bytes = weight_bytes + stream_bytes + act_bytes + (4 << 20)
    vmem_limit = int(min(96 << 20, max(est_bytes, 32 << 20)))

    out = pl.pallas_call(
        _ensamble_apply_kernel,
        out_shape=jax.ShapeDtypeStruct((B, classes), f32),
        grid=grid,
        in_specs=[ctx_spec, deep_spec] + [const_spec(a) for a in weight_args],
        out_specs=pl.BlockSpec((block_b, classes), lambda i: (i, 0)),
        compiler_params=pltpu.CompilerParams(
            dimension_semantics=("parallel",),   # megacore batch sharding (v7x)
            vmem_limit_bytes=vmem_limit),
    )(context, deep_context, *weight_args)
    return out


def init_params(key, num_preprocessors, classes):
    """Deterministic init matching the PyTorch layer shapes.

    Linear weights are stored transposed ((in, out)); w1/w2 in bf16 (the two
    wide GEMM operands), everything else f32. Biases are (1, out) rows, BN
    gamma/beta are (1, features) rows for clean broadcasting in (batch,
    features) layout.
    """
    P = num_preprocessors
    D = P * 256

    def linear(key, fan_in, fan_out, w_dtype=jnp.float32):
        kw, kb = jax.random.split(key)
        bound = 1.0 / math.sqrt(fan_in)
        w = jax.random.uniform(kw, (fan_in, fan_out), jnp.float32, -bound, bound)
        b = jax.random.uniform(kb, (1, fan_out), jnp.float32, -bound, bound)
        return w.astype(w_dtype), b

    k1, k2, k3, k4 = jax.random.split(key, 4)
    w1, b1 = linear(k1, D, 512, jnp.bfloat16)
    w2, b2 = linear(k2, 512, 128, jnp.bfloat16)
    wc, bc = linear(k3, P + 128, 10)
    wo, bo = linear(k4, 10, classes)

    return {
        # BatchNorm1d defaults: gamma = 1, beta = 0
        "g_prep": jnp.ones((1, P), jnp.float32),
        "b_prep": jnp.zeros((1, P), jnp.float32),
        "g_deep": jnp.ones((1, D), jnp.float32),
        "b_deep": jnp.zeros((1, D), jnp.float32),
        "w1": w1, "b1": b1,
        "w2": w2, "b2": b2,
        "wc_ctx": wc[:P, :], "wc_deep": wc[P:, :], "bc": bc,
        "wo": wo, "bo": bo,
    }


def reference_forward(context, deep_context, p):
    """Pure-JAX reference mirroring the PyTorch forward (train-mode BN) with
    the same mixed-precision policy as the kernel (bf16 w1/w2 GEMMs)."""
    def bn(x, g, b):
        m = jnp.mean(x, axis=0, keepdims=True)
        v = jnp.mean((x - m) ** 2, axis=0, keepdims=True)
        scale = g * jax.lax.rsqrt(v + BN_EPS)
        return x * scale + (b - m * scale)

    def elu(x):
        return jnp.where(x > 0, x, jnp.exp(jnp.minimum(x, 0.0)) - 1.0)

    ctx = bn(context, p["g_prep"], p["b_prep"])
    deep = bn(deep_context, p["g_deep"], p["b_deep"])
    h = elu(jnp.dot(deep.astype(jnp.bfloat16), p["w1"],
                    preferred_element_type=jnp.float32) + p["b1"])
    h = elu(jnp.dot(h.astype(jnp.bfloat16), p["w2"],
                    preferred_element_type=jnp.float32) + p["b2"])
    c = elu(jnp.dot(ctx, p["wc_ctx"], preferred_element_type=jnp.float32)
            + jnp.dot(h, p["wc_deep"], preferred_element_type=jnp.float32)
            + p["bc"])
    logits = jnp.dot(c, p["wo"], preferred_element_type=jnp.float32) + p["bo"]
    return jax.nn.log_softmax(logits, axis=1)


if __name__ == "__main__":
    # 4 preprocessors (each contributing a (B,1) prediction and a (B,256)
    # layer), 10 classes. Batch of 256 with a tile of 128 exercises the
    # two-pass BN + pipelined batch grid (2 tiles).
    B, P, CLASSES = 256, 4, 10
    BLOCK_B = 128

    key = jax.random.PRNGKey(0)
    k_params, k_ctx, k_deep = jax.random.split(key, 3)

    params = init_params(k_params, P, CLASSES)

    # TODO(synk): the preprocessor sub-networks are external nn.Modules; their
    # concatenated outputs are synthesized here as the kernel's inputs.
    context = jax.random.normal(k_ctx, (B, P), jnp.float32)           # cat(predictions)
    deep_context = jax.random.normal(k_deep, (B, P * 256), jnp.float32)  # cat(layers)

    out = ensamble42_forward(context, deep_context, params, block_b=BLOCK_B)
    out = jax.block_until_ready(out)

    ref = reference_forward(context, deep_context, params)
    assert out.shape == (B, CLASSES)
    assert jnp.allclose(out, ref, atol=2e-3, rtol=2e-3), "mismatch vs. JAX reference"

    print("KERNEL_OK")
</pallas_src>

<mosaic_0001>
module attributes {stable_mosaic.version = 11 : i64} {
  func.func @_bn_stats_kernel(%arg0: i32, %arg1: memref<128x4xf32, #tpu.memory_space<vmem>>, %arg2: memref<128x1024xf32, #tpu.memory_space<vmem>>, %arg3: memref<1x4xf32, #tpu.memory_space<vmem>>, %arg4: memref<1x4xf32, #tpu.memory_space<vmem>>, %arg5: memref<1x1024xf32, #tpu.memory_space<vmem>>, %arg6: memref<1x1024xf32, #tpu.memory_space<vmem>>, %arg7: memref<1x4xf32, #tpu.memory_space<vmem>>, %arg8: memref<1x4xf32, #tpu.memory_space<vmem>>, %arg9: memref<1x1024xf32, #tpu.memory_space<vmem>>, %arg10: memref<1x1024xf32, #tpu.memory_space<vmem>>, %arg11: memref<1x4xf32, #tpu.memory_space<vmem>>, %arg12: memref<1x4xf32, #tpu.memory_space<vmem>>, %arg13: memref<1x1024xf32, #tpu.memory_space<vmem>>, %arg14: memref<1x1024xf32, #tpu.memory_space<vmem>>) attributes {dimension_semantics = [#tpu.dimension_semantics<arbitrary>], iteration_bounds = array<i64: 2>, scalar_prefetch = 0 : i64, scratch_operands = 4 : i64, tpu.core_type = #tpu.core_type<tc>, window_params = [{transform_indices = @transform_0, window_bounds = array<i64: 128, 4>}, {transform_indices = @transform_1, window_bounds = array<i64: 128, 1024>}, {pipeline_mode = #tpu.pipeline_mode<synchronous>, transform_indices = @transform_2, window_bounds = array<i64: 1, 4>}, {pipeline_mode = #tpu.pipeline_mode<synchronous>, transform_indices = @transform_3, window_bounds = array<i64: 1, 4>}, {pipeline_mode = #tpu.pipeline_mode<synchronous>, transform_indices = @transform_4, window_bounds = array<i64: 1, 1024>}, {pipeline_mode = #tpu.pipeline_mode<synchronous>, transform_indices = @transform_5, window_bounds = array<i64: 1, 1024>}, {pipeline_mode = #tpu.pipeline_mode<synchronous>, transform_indices = @transform_6, window_bounds = array<i64: 1, 4>}, {pipeline_mode = #tpu.pipeline_mode<synchronous>, transform_indices = @transform_7, window_bounds = array<i64: 1, 4>}, {pipeline_mode = #tpu.pipeline_mode<synchronous>, transform_indices = @transform_8, window_bounds = array<i64: 1, 1024>}, {pipeline_mode = #tpu.pipeline_mode<synchronous>, transform_indices = @transform_9, window_bounds = array<i64: 1, 1024>}]} {
    %c0_i32 = arith.constant 0 : i32
    %0 = arith.cmpi eq, %arg0, %c0_i32 : i32
    %1 = arith.extui %0 : i1 to i32
    %c0_i32_0 = arith.constant 0 : i32
    %2 = arith.cmpi ne, %1, %c0_i32_0 : i32
    scf.if %2 {
      %cst_24 = arith.constant 0.000000e+00 : f32
      %30 = vector.broadcast %cst_24 : f32 to vector<1x4xf32>
      %c0_25 = arith.constant 0 : index
      %c0_26 = arith.constant 0 : index
      %31 = vector.load %arg11[%c0_25, %c0_26] : memref<1x4xf32, #tpu.memory_space<vmem>>, vector<1x4xf32>
      tpu.vector_store %arg11[%c0_25, %c0_26], %30 {strides = array<i32>} : memref<1x4xf32, #tpu.memory_space<vmem>>, vector<1x4xf32>,
      %cst_27 = arith.constant 0.000000e+00 : f32
      %32 = vector.broadcast %cst_27 : f32 to vector<1x4xf32>
      %c0_28 = arith.constant 0 : index
      %c0_29 = arith.constant 0 : index
      %33 = vector.load %arg12[%c0_28, %c0_29] : memref<1x4xf32, #tpu.memory_space<vmem>>, vector<1x4xf32>
      tpu.vector_store %arg12[%c0_28, %c0_29], %32 {strides = array<i32>} : memref<1x4xf32, #tpu.memory_space<vmem>>, vector<1x4xf32>,
      %cst_30 = arith.constant 0.000000e+00 : f32
      %34 = vector.broadcast %cst_30 : f32 to vector<1x1024xf32>
      %c0_31 = arith.constant 0 : index
      %c0_32 = arith.constant 0 : index
      %35 = vector.load %arg13[%c0_31, %c0_32] : memref<1x1024xf32, #tpu.memory_space<vmem>>, vector<1x1024xf32>
      tpu.vector_store %arg13[%c0_31, %c0_32], %34 {strides = array<i32>} : memref<1x1024xf32, #tpu.memory_space<vmem>>, vector<1x1024xf32>,
      %cst_33 = arith.constant 0.000000e+00 : f32
      %36 = vector.broadcast %cst_33 : f32 to vector<1x1024xf32>
      %c0_34 = arith.constant 0 : index
      %c0_35 = arith.constant 0 : index
      %37 = vector.load %arg14[%c0_34, %c0_35] : memref<1x1024xf32, #tpu.memory_space<vmem>>, vector<1x1024xf32>
      tpu.vector_store %arg14[%c0_34, %c0_35], %36 {strides = array<i32>} : memref<1x1024xf32, #tpu.memory_space<vmem>>, vector<1x1024xf32>,
    } else {
    }
    %c0 = arith.constant 0 : index
    %c0_1 = arith.constant 0 : index
    %3 = vector.load %arg1[%c0, %c0_1] : memref<128x4xf32, #tpu.memory_space<vmem>>, vector<128x4xf32>
    %c0_2 = arith.constant 0 : index
    %c0_3 = arith.constant 0 : index
    %4 = vector.load %arg2[%c0_2, %c0_3] : memref<128x1024xf32, #tpu.memory_space<vmem>>, vector<128x1024xf32>
    %c0_4 = arith.constant 0 : index
    %c0_5 = arith.constant 0 : index
    %5 = vector.load %arg11[%c0_4, %c0_5] : memref<1x4xf32, #tpu.memory_space<vmem>>, vector<1x4xf32>
    %cst = arith.constant dense<0.000000e+00> : vector<4xf32>
    %6 = vector.multi_reduction <add>, %3, %cst [0] : vector<128x4xf32> to vector<4xf32>
    %7 = vector.shape_cast %6 : vector<4xf32> to vector<1x4xf32>
    %8 = arith.addf %5, %7 : vector<1x4xf32>
    %c0_6 = arith.constant 0 : index
    %c0_7 = arith.constant 0 : index
    %9 = vector.load %arg11[%c0_6, %c0_7] : memref<1x4xf32, #tpu.memory_space<vmem>>, vector<1x4xf32>
    tpu.vector_store %arg11[%c0_6, %c0_7], %8 {strides = array<i32>} : memref<1x4xf32, #tpu.memory_space<vmem>>, vector<1x4xf32>,
    %c0_8 = arith.constant 0 : index
    %c0_9 = arith.constant 0 : index
    %10 = vector.load %arg12[%c0_8, %c0_9] : memref<1x4xf32, #tpu.memory_space<vmem>>, vector<1x4xf32>
    %11 = arith.mulf %3, %3 : vector<128x4xf32>
    %cst_10 = arith.constant dense<0.000000e+00> : vector<4xf32>
    %12 = vector.multi_reduction <add>, %11, %cst_10 [0] : vector<128x4xf32> to vector<4xf32>
    %13 = vector.shape_cast %12 : vector<4xf32> to vector<1x4xf32>
    %14 = arith.addf %10, %13 : vector<1x4xf32>
    %c0_11 = arith.constant 0 : index
    %c0_12 = arith.constant 0 : index
    %15 = vector.load %arg12[%c0_11, %c0_12] : memref<1x4xf32, #tpu.memory_space<vmem>>, vector<1x4xf32>
    tpu.vector_store %arg12[%c0_11, %c0_12], %14 {strides = array<i32>} : memref<1x4xf32, #tpu.memory_space<vmem>>, vector<1x4xf32>,
    %c0_13 = arith.constant 0 : index
    %c0_14 = arith.constant 0 : index
    %16 = vector.load %arg13[%c0_13, %c0_14] : memref<1x1024xf32, #tpu.memory_space<vmem>>, vector<1x1024xf32>
    %cst_15 = arith.constant dense<0.000000e+00> : vector<1024xf32>
    %17 = vector.multi_reduction <add>, %4, %cst_15 [0] : vector<128x1024xf32> to vector<1024xf32>
    %18 = vector.shape_cast %17 : vector<1024xf32> to vector<1x1024xf32>
    %19 = arith.addf %16, %18 : vector<1x1024xf32>
    %c0_16 = arith.constant 0 : index
    %c0_17 = arith.constant 0 : index
    %20 = vector.load %arg13[%c0_16, %c0_17] : memref<1x1024xf32, #tpu.memory_space<vmem>>, vector<1x1024xf32>
    tpu.vector_store %arg13[%c0_16, %c0_17], %19 {strides = array<i32>} : memref<1x1024xf32, #tpu.memory_space<vmem>>, vector<1x1024xf32>,
    %c0_18 = arith.constant 0 : index
    %c0_19 = arith.constant 0 : index
    %21 = vector.load %arg14[%c0_18, %c0_19] : memref<1x1024xf32, #tpu.memory_space<vmem>>, vector<1x1024xf32>
    %22 = arith.mulf %4, %4 : vector<128x1024xf32>
    %cst_20 = arith.constant dense<0.000000e+00> : vector<1024xf32>
    %23 = vector.multi_reduction <add>, %22, %cst_20 [0] : vector<128x1024xf32> to vector<1024xf32>
    %24 = vector.shape_cast %23 : vector<1024xf32> to vector<1x1024xf32>
    %25 = arith.addf %21, %24 : vector<1x1024xf32>
    %c0_21 = arith.constant 0 : index
    %c0_22 = arith.constant 0 : index
    %26 = vector.load %arg14[%c0_21, %c0_22] : memref<1x1024xf32, #tpu.memory_space<vmem>>, vector<1x1024xf32>
    tpu.vector_store %arg14[%c0_21, %c0_22], %25 {strides = array<i32>} : memref<1x1024xf32, #tpu.memory_space<vmem>>, vector<1x1024xf32>,
    %c1_i32 = arith.constant 1 : i32
    %27 = arith.cmpi eq, %arg0, %c1_i32 : i32
    %28 = arith.extui %27 : i1 to i32
    %c0_i32_23 = arith.constant 0 : i32
    %29 = arith.cmpi ne, %28, %c0_i32_23 : i32
    scf.if %29 {
      %c0_24 = arith.constant 0 : index
      %c0_25 = arith.constant 0 : index
      %30 = vector.load %arg11[%c0_24, %c0_25] : memref<1x4xf32, #tpu.memory_space<vmem>>, vector<1x4xf32>
      %c0_26 = arith.constant 0 : index
      %c0_27 = arith.constant 0 : index
      %31 = vector.load %arg12[%c0_26, %c0_27] : memref<1x4xf32, #tpu.memory_space<vmem>>, vector<1x4xf32>
      %c0_28 = arith.constant 0 : index
      %c0_29 = arith.constant 0 : index
      %32 = vector.load %arg3[%c0_28, %c0_29] : memref<1x4xf32, #tpu.memory_space<vmem>>, vector<1x4xf32>
      %c0_30 = arith.constant 0 : index
      %c0_31 = arith.constant 0 : index
      %33 = vector.load %arg4[%c0_30, %c0_31] : memref<1x4xf32, #tpu.memory_space<vmem>>, vector<1x4xf32>
      %cst_32 = arith.constant 3.906250e-03 : f32
      %34 = vector.broadcast %cst_32 : f32 to vector<1x4xf32>
      %35 = arith.mulf %30, %34 : vector<1x4xf32>
      %cst_33 = arith.constant 3.906250e-03 : f32
      %36 = vector.broadcast %cst_33 : f32 to vector<1x4xf32>
      %37 = arith.mulf %31, %36 : vector<1x4xf32>
      %38 = arith.mulf %35, %35 : vector<1x4xf32>
      %39 = arith.subf %37, %38 : vector<1x4xf32>
      %cst_34 = arith.constant 9.99999974E-6 : f32
      %40 = vector.broadcast %cst_34 : f32 to vector<1x4xf32>
      %41 = arith.addf %39, %40 : vector<1x4xf32>
      %42 = math.rsqrt %41 : vector<1x4xf32>
      %43 = arith.mulf %32, %42 : vector<1x4xf32>
      %44 = arith.mulf %35, %43 : vector<1x4xf32>
      %45 = arith.subf %33, %44 : vector<1x4xf32>
      %c0_35 = arith.constant 0 : index
      %c0_36 = arith.constant 0 : index
      %46 = vector.load %arg7[%c0_35, %c0_36] : memref<1x4xf32, #tpu.memory_space<vmem>>, vector<1x4xf32>
      tpu.vector_store %arg7[%c0_35, %c0_36], %43 {strides = array<i32>} : memref<1x4xf32, #tpu.memory_space<vmem>>, vector<1x4xf32>,
      %c0_37 = arith.constant 0 : index
      %c0_38 = arith.constant 0 : index
      %47 = vector.load %arg8[%c0_37, %c0_38] : memref<1x4xf32, #tpu.memory_space<vmem>>, vector<1x4xf32>
      tpu.vector_store %arg8[%c0_37, %c0_38], %45 {strides = array<i32>} : memref<1x4xf32, #tpu.memory_space<vmem>>, vector<1x4xf32>,
      %c0_39 = arith.constant 0 : index
      %c0_40 = arith.constant 0 : index
      %48 = vector.load %arg13[%c0_39, %c0_40] : memref<1x1024xf32, #tpu.memory_space<vmem>>, vector<1x1024xf32>
      %c0_41 = arith.constant 0 : index
      %c0_42 = arith.constant 0 : index
      %49 = vector.load %arg14[%c0_41, %c0_42] : memref<1x1024xf32, #tpu.memory_space<vmem>>, vector<1x1024xf32>
      %c0_43 = arith.constant 0 : index
      %c0_44 = arith.constant 0 : index
      %50 = vector.load %arg5[%c0_43, %c0_44] : memref<1x1024xf32, #tpu.memory_space<vmem>>, vector<1x1024xf32>
      %c0_45 = arith.constant 0 : index
      %c0_46 = arith.constant 0 : index
      %51 = vector.load %arg6[%c0_45, %c0_46] : memref<1x1024xf32, #tpu.memory_space<vmem>>, vector<1x1024xf32>
      %cst_47 = arith.constant 3.906250e-03 : f32
      %52 = vector.broadcast %cst_47 : f32 to vector<1x1024xf32>
      %53 = arith.mulf %48, %52 : vector<1x1024xf32>
      %cst_48 = arith.constant 3.906250e-03 : f32
      %54 = vector.broadcast %cst_48 : f32 to vector<1x1024xf32>
      %55 = arith.mulf %49, %54 : vector<1x1024xf32>
      %56 = arith.mulf %53, %53 : vector<1x1024xf32>
      %57 = arith.subf %55, %56 : vector<1x1024xf32>
      %cst_49 = arith.constant 9.99999974E-6 : f32
      %58 = vector.broadcast %cst_49 : f32 to vector<1x1024xf32>
      %59 = arith.addf %57, %58 : vector<1x1024xf32>
      %60 = math.rsqrt %59 : vector<1x1024xf32>
      %61 = arith.mulf %50, %60 : vector<1x1024xf32>
      %62 = arith.mulf %53, %61 : vector<1x1024xf32>
      %63 = arith.subf %51, %62 : vector<1x1024xf32>
      %c0_50 = arith.constant 0 : index
      %c0_51 = arith.constant 0 : index
      %64 = vector.load %arg9[%c0_50, %c0_51] : memref<1x1024xf32, #tpu.memory_space<vmem>>, vector<1x1024xf32>
      tpu.vector_store %arg9[%c0_50, %c0_51], %61 {strides = array<i32>} : memref<1x1024xf32, #tpu.memory_space<vmem>>, vector<1x1024xf32>,
      %c0_52 = arith.constant 0 : index
      %c0_53 = arith.constant 0 : index
      %65 = vector.load %arg10[%c0_52, %c0_53] : memref<1x1024xf32, #tpu.memory_space<vmem>>, vector<1x1024xf32>
      tpu.vector_store %arg10[%c0_52, %c0_53], %63 {strides = array<i32>} : memref<1x1024xf32, #tpu.memory_space<vmem>>, vector<1x1024xf32>,
    } else {
    }
    return
  }
  func.func @transform_0(%arg0: i32) -> (i32, i32) {
    %c0_i32 = arith.constant 0 : i32
    %c0_i32_0 = arith.constant 0 : i32
    return %arg0, %c0_i32 : i32, i32
  }
  func.func @transform_1(%arg0: i32) -> (i32, i32) {
    %c0_i32 = arith.constant 0 : i32
    %c0_i32_0 = arith.constant 0 : i32
    return %arg0, %c0_i32 : i32, i32
  }
  func.func @transform_2(%arg0: i32) -> (i32, i32) {
    %c0_i32 = arith.constant 0 : i32
    %c0_i32_0 = arith.constant 0 : i32
    %c0_i32_1 = arith.constant 0 : i32
    return %c0_i32, %c0_i32_0 : i32, i32
  }
  func.func @transform_3(%arg0: i32) -> (i32, i32) {
    %c0_i32 = arith.constant 0 : i32
    %c0_i32_0 = arith.constant 0 : i32
    %c0_i32_1 = arith.constant 0 : i32
    return %c0_i32, %c0_i32_0 : i32, i32
  }
  func.func @transform_4(%arg0: i32) -> (i32, i32) {
    %c0_i32 = arith.constant 0 : i32
    %c0_i32_0 = arith.constant 0 : i32
    %c0_i32_1 = arith.constant 0 : i32
    return %c0_i32, %c0_i32_0 : i32, i32
  }
  func.func @transform_5(%arg0: i32) -> (i32, i32) {
    %c0_i32 = arith.constant 0 : i32
    %c0_i32_0 = arith.constant 0 : i32
    %c0_i32_1 = arith.constant 0 : i32
    return %c0_i32, %c0_i32_0 : i32, i32
  }
  func.func @transform_6(%arg0: i32) -> (i32, i32) {
    %c0_i32 = arith.constant 0 : i32
    %c0_i32_0 = arith.constant 0 : i32
    %c0_i32_1 = arith.constant 0 : i32
    return %c0_i32, %c0_i32_0 : i32, i32
  }
  func.func @transform_7(%arg0: i32) -> (i32, i32) {
    %c0_i32 = arith.constant 0 : i32
    %c0_i32_0 = arith.constant 0 : i32
    %c0_i32_1 = arith.constant 0 : i32
    return %c0_i32, %c0_i32_0 : i32, i32
  }
  func.func @transform_8(%arg0: i32) -> (i32, i32) {
    %c0_i32 = arith.constant 0 : i32
    %c0_i32_0 = arith.constant 0 : i32
    %c0_i32_1 = arith.constant 0 : i32
    return %c0_i32, %c0_i32_0 : i32, i32
  }
  func.func @transform_9(%arg0: i32) -> (i32, i32) {
    %c0_i32 = arith.constant 0 : i32
    %c0_i32_0 = arith.constant 0 : i32
    %c0_i32_1 = arith.constant 0 : i32
    return %c0_i32, %c0_i32_0 : i32, i32
  }
}

</mosaic_0001>

<llo_original>
// kernel: tpu_custom_call.1
$region0: #{tpu_custom_call.1}
  #allocation0 [shape = 'u32[]', space=smem, size = 0x4, offset = 0x4, fixed_abs, tag = 'smem constant byte address 0x4 - core index']
  #allocation1 [shape = 'u32[144,128]{1,0:T(1,128)}', space=vmem, size = 0x12000, scoped, tag = 'internal scratch']
  #allocation2 [shape = 'f32[1,4]{1,0:T(1,128)}', space=vmem, size = 0x200, scoped, tag = 'scratch operand']
  #allocation3 [shape = 'f32[1,4]{1,0:T(1,128)}', space=vmem, size = 0x200, scoped, tag = 'scratch operand']
  #allocation4 [shape = 'f32[1,1024]{1,0:T(1,128)}', space=vmem, size = 0x1000, scoped, tag = 'scratch operand']
  #allocation5 [shape = 'f32[1,1024]{1,0:T(1,128)}', space=vmem, size = 0x1000, scoped, tag = 'scratch operand']
  %s0 = inlined_call_operand.vmem [shape: f32[256,4], index: 0, kind: input, shape index: {}]
  %s1 = inlined_call_operand.hbm [shape: f32[256,1024], index: 1, kind: input, shape index: {}]
  %s2 = inlined_call_operand.vmem [shape: f32[1,4], index: 2, kind: input, shape index: {}]
  %s3 = inlined_call_operand.vmem [shape: f32[1,4], index: 3, kind: input, shape index: {}]
  %s4 = inlined_call_operand.vmem [shape: f32[1,1024], index: 4, kind: input, shape index: {}]
  %s5 = inlined_call_operand.vmem [shape: f32[1,1024], index: 5, kind: input, shape index: {}]
  %s6 = inlined_call_operand.hbm [shape: f32[1,4], index: 6, kind: output, shape index: {0}]
  %s7 = inlined_call_operand.hbm [shape: f32[1,4], index: 7, kind: output, shape index: {1}]
  %s8 = inlined_call_operand.hbm [shape: f32[1,1024], index: 8, kind: output, shape index: {2}]
  %s9 = inlined_call_operand.hbm [shape: f32[1,1024], index: 9, kind: output, shape index: {3}]
  %10 = xla_tuple %s6, %s7, %s8, %s9
  %s11 = sld [smem:[#allocation0]]
  $region93: #{tpu_custom_call.1} parent=0
    _
  %s13 = ssub.s32 1, %s11
  %s14 = scalar_select 0, %s13, %s11
  $region1: #{tpu_custom_call.1} parent=0
    #allocation6 [shape = 'u8[1048576]{0}', space=vmem, size = 0x100000, scoped, tag = 'input window, operand 1']
    #allocation7 [shape = 's32[2]{0}', space=sflag, size = 0x8, scoped, tag = 'scoped memory for tpu_custom_call.1']
    #allocation8 [shape = 's32[2]{0}', space=sflag, size = 0x8, scoped, tag = 'scoped memory for tpu_custom_call.1']
    #allocation9 [shape = 'u8[512]{0}', space=vmem, size = 0x400, scoped, tag = 'output window, operand 0, single buffered']
    #allocation10 [shape = 'u8[512]{0}', space=vmem, size = 0x400, scoped, tag = 'output window, operand 1, single buffered']
    #allocation11 [shape = 's32[1]{0}', space=sflag, size = 0x4, scoped, tag = 'scoped memory for tpu_custom_call.1']
    #allocation12 [shape = 'u8[4096]{0}', space=vmem, size = 0x1000, scoped, tag = 'output window, operand 2, single buffered']
    #allocation13 [shape = 'u8[4096]{0}', space=vmem, size = 0x1000, scoped, tag = 'output window, operand 3, single buffered']
    #allocation14 [shape = 's32[1]{0}', space=sflag, size = 0x4, scoped, tag = 'scoped memory for tpu_custom_call.1']
    %15 = vsyncpa [#allocation7], 0
    %s16 = scalar_lea.sflag [#allocation7], 1
    %17 = vsyncpa %s16, 0
    %18 = vsyncpa [#allocation8], 0
    %19 = vsyncpa [#allocation11], 0
    %20 = vsyncpa [#allocation14], 0
    loop: start=0, step=1, limit=4
    $region2: #{tpu_custom_call.1} parent=1 // loop_pre_header
      _
    $region3: #{tpu_custom_call.1} parent=1 // loop_header
      %s22 = sphi 0, %s26
      %p23 = scmp.ge.s32.totalorder %s22, 4
      %s32 = sphi 0, %s34
      %s35 = sphi 0, %s32
      %s36 = sphi 0, %s35
      %s52 = sphi 0, %s36
      %s58 = sphi 0, %s60
      %s61 = sphi 0, %s58
      %s62 = sphi 0, %s61
      %s78 = sphi 0, %s62
      %s82 = sphi 0, %s82
      %s84 = sphi 0, %s82
      %s85 = sphi 0, %s84
      %s99 = sphi 0, %s85
      %s103 = sphi 0, %s103
      %s105 = sphi 0, %s103
      %s106 = sphi 0, %s105
      %s120 = sphi 0, %s106
      %s124 = sphi 0, %s124
      %s126 = sphi 0, %s124
      %s127 = sphi 0, %s126
      %s141 = sphi 0, %s127
      %s145 = sphi 0, %s145
      %s147 = sphi 0, %s145
      %s148 = sphi 0, %s147
      %s162 = sphi 0, %s148
      %s166 = sphi 0, %s166
      %s168 = sphi 0, %s166
      %s169 = sphi 0, %s168
      %s183 = sphi 0, %s169
      %s187 = sphi 0, %s187
      %s189 = sphi 0, %s187
      %s190 = sphi 0, %s189
      %s204 = sphi 0, %s190
      %s208 = sphi 0, %s208
      %s210 = sphi 0, %s208
      %s211 = sphi 0, %s210
      %s225 = sphi 0, %s211
      %s229 = sphi 0, %s229
      %s231 = sphi 0, %s229
      %s232 = sphi 0, %s231
      %s246 = sphi 0, %s232
    $region4: #{tpu_custom_call.1} parent=1 // loop_header_branch
      %25 = sbr.rel (%p23) target = $region8
    $region5: #{tpu_custom_call.1} parent=1 // loop_body
      %s27 = ssub.s32 %s22, 1
      %s28 = ssub.s32 %s22, 2
      %s29 = sadd.s32 %s22, 1
      %s30 = ssub.s32 %s22, %s29
      %p31 = scmp.eq.s32.totalorder %s30, 0
      %s33 = sadd.s32 %s32, 1
      %s34 = scalar_select %p31, %s32, %s33
      %p37 = pneg %p31
      %p38 = scmp.eq.s32.totalorder %s22, 1
      %p39 = por %p37, %p38
      %p40 = scmp.ne.s32.totalorder %s32, %s35
      %p41 = scmp.eq.s32.totalorder %s22, 0
      %p42 = por %p40, %p41
      %p43 = scmp.ne.s32.totalorder %s32, %s35
      %p44 = scmp.eq.s32.totalorder %s27, 1
      %p45 = por %p43, %p44
      %p46 = scmp.ne.s32.totalorder %s35, %s36
      %p47 = scmp.eq.s32.totalorder %s27, 0
      %p48 = por %p46, %p47
      %p49 = scmp.ne.s32.totalorder %s35, %s36
      %p50 = scmp.eq.s32.totalorder %s28, 1
      %p51 = por %p49, %p50
      %p53 = scmp.ne.s32.totalorder %s36, %s52
      %p54 = scmp.eq.s32.totalorder %s28, 0
      %p55 = por %p53, %p54
      %s56 = ssub.s32 %s22, %s29
      %p57 = scmp.eq.s32.totalorder %s56, 0
      %s59 = sadd.s32 %s58, 1
      %s60 = scalar_select %p57, %s58, %s59
      %p63 = pneg %p57
      %p64 = scmp.eq.s32.totalorder %s22, 1
      %p65 = por %p63, %p64
      %p66 = scmp.ne.s32.totalorder %s58, %s61
      %p67 = scmp.eq.s32.totalorder %s22, 0
      %p68 = por %p66, %p67
      %p69 = scmp.ne.s32.totalorder %s58, %s61
      %p70 = scmp.eq.s32.totalorder %s27, 1
      %p71 = por %p69, %p70
      %p72 = scmp.ne.s32.totalorder %s61, %s62
      %p73 = scmp.eq.s32.totalorder %s27, 0
      %p74 = por %p72, %p73
      %p75 = scmp.ne.s32.totalorder %s61, %s62
      %p76 = scmp.eq.s32.totalorder %s28, 1
      %p77 = por %p75, %p76
      %p79 = scmp.ne.s32.totalorder %s62, %s78
      %p80 = scmp.eq.s32.totalorder %s28, 0
      %p81 = por %p79, %p80
      %s83 = sadd.s32 %s82, 1
      %p86 = scmp.eq.s32.totalorder %s22, 1
      %p87 = scmp.ne.s32.totalorder %s82, %s84
      %p88 = scmp.eq.s32.totalorder %s22, 0
      %p89 = por %p87, %p88
      %p90 = scmp.ne.s32.totalorder %s82, %s84
      %p91 = scmp.eq.s32.totalorder %s27, 1
      %p92 = por %p90, %p91
      %p93 = scmp.ne.s32.totalorder %s84, %s85
      %p94 = scmp.eq.s32.totalorder %s27, 0
      %p95 = por %p93, %p94
      %p96 = scmp.ne.s32.totalorder %s84, %s85
      %p97 = scmp.eq.s32.totalorder %s28, 1
      %p98 = por %p96, %p97
      %p100 = scmp.ne.s32.totalorder %s85, %s99
      %p101 = scmp.eq.s32.totalorder %s28, 0
      %p102 = por %p100, %p101
      %s104 = sadd.s32 %s103, 1
      %p107 = scmp.eq.s32.totalorder %s22, 1
      %p108 = scmp.ne.s32.totalorder %s103, %s105
      %p109 = scmp.eq.s32.totalorder %s22, 0
      %p110 = por %p108, %p109
      %p111 = scmp.ne.s32.totalorder %s103, %s105
      %p112 = scmp.eq.s32.totalorder %s27, 1
      %p113 = por %p111, %p112
      %p114 = scmp.ne.s32.totalorder %s105, %s106
      %p115 = scmp.eq.s32.totalorder %s27, 0
      %p116 = por %p114, %p115
      %p117 = scmp.ne.s32.totalorder %s105, %s106
      %p118 = scmp.eq.s32.totalorder %s28, 1
      %p119 = por %p117, %p118
      %p121 = scmp.ne.s32.totalorder %s106, %s120
      %p122 = scmp.eq.s32.totalorder %s28, 0
      %p123 = por %p121, %p122
      %s125 = sadd.s32 %s124, 1
      %p128 = scmp.eq.s32.totalorder %s22, 1
      %p129 = scmp.ne.s32.totalorder %s124, %s126
      %p130 = scmp.eq.s32.totalorder %s22, 0
      %p131 = por %p129, %p130
      %p132 = scmp.ne.s32.totalorder %s124, %s126
      %p133 = scmp.eq.s32.totalorder %s27, 1
      %p134 = por %p132, %p133
      %p135 = scmp.ne.s32.totalorder %s126, %s127
      %p136 = scmp.eq.s32.totalorder %s27, 0
      %p137 = por %p135, %p136
      %p138 = scmp.ne.s32.totalorder %s126, %s127
      %p139 = scmp.eq.s32.totalorder %s28, 1
      %p140 = por %p138, %p139
      %p142 = scmp.ne.s32.totalorder %s127, %s141
      %p143 = scmp.eq.s32.totalorder %s28, 0
      %p144 = por %p142, %p143
      %s146 = sadd.s32 %s145, 1
      %p149 = scmp.eq.s32.totalorder %s22, 1
      %p150 = scmp.ne.s32.totalorder %s145, %s147
      %p151 = scmp.eq.s32.totalorder %s22, 0
      %p152 = por %p150, %p151
      %p153 = scmp.ne.s32.totalorder %s145, %s147
      %p154 = scmp.eq.s32.totalorder %s27, 1
      %p155 = por %p153, %p154
      %p156 = scmp.ne.s32.totalorder %s147, %s148
      %p157 = scmp.eq.s32.totalorder %s27, 0
      %p158 = por %p156, %p157
      %p159 = scmp.ne.s32.totalorder %s147, %s148
      %p160 = scmp.eq.s32.totalorder %s28, 1
      %p161 = por %p159, %p160
      %p163 = scmp.ne.s32.totalorder %s148, %s162
      %p164 = scmp.eq.s32.totalorder %s28, 0
      %p165 = por %p163, %p164
      %s167 = sadd.s32 %s166, 1
      %p170 = scmp.eq.s32.totalorder %s22, 1
      %p171 = scmp.ne.s32.totalorder %s166, %s168
      %p172 = scmp.eq.s32.totalorder %s22, 0
      %p173 = por %p171, %p172
      %p174 = scmp.ne.s32.totalorder %s166, %s168
      %p175 = scmp.eq.s32.totalorder %s27, 1
      %p176 = por %p174, %p175
      %p177 = scmp.ne.s32.totalorder %s168, %s169
      %p178 = scmp.eq.s32.totalorder %s27, 0
      %p179 = por %p177, %p178
      %p180 = scmp.ne.s32.totalorder %s168, %s169
      %p181 = scmp.eq.s32.totalorder %s28, 1
      %p182 = por %p180, %p181
      %p184 = scmp.ne.s32.totalorder %s169, %s183
      %p185 = scmp.eq.s32.totalorder %s28, 0
      %p186 = por %p184, %p185
      %s188 = sadd.s32 %s187, 1
      %p191 = scmp.eq.s32.totalorder %s22, 1
      %p192 = scmp.ne.s32.totalorder %s187, %s189
      %p193 = scmp.eq.s32.totalorder %s22, 0
      %p194 = por %p192, %p193
      %p195 = scmp.ne.s32.totalorder %s187, %s189
      %p196 = scmp.eq.s32.totalorder %s27, 1
      %p197 = por %p195, %p196
      %p198 = scmp.ne.s32.totalorder %s189, %s190
      %p199 = scmp.eq.s32.totalorder %s27, 0
      %p200 = por %p198, %p199
      %p201 = scmp.ne.s32.totalorder %s189, %s190
      %p202 = scmp.eq.s32.totalorder %s28, 1
      %p203 = por %p201, %p202
      %p205 = scmp.ne.s32.totalorder %s190, %s204
      %p206 = scmp.eq.s32.totalorder %s28, 0
      %p207 = por %p205, %p206
      %s209 = sadd.s32 %s208, 1
      %p212 = scmp.eq.s32.totalorder %s22, 1
      %p213 = scmp.ne.s32.totalorder %s208, %s210
      %p214 = scmp.eq.s32.totalorder %s22, 0
      %p215 = por %p213, %p214
      %p216 = scmp.ne.s32.totalorder %s208, %s210
      %p217 = scmp.eq.s32.totalorder %s27, 1
      %p218 = por %p216, %p217
      %p219 = scmp.ne.s32.totalorder %s210, %s211
      %p220 = scmp.eq.s32.totalorder %s27, 0
      %p221 = por %p219, %p220
      %p222 = scmp.ne.s32.totalorder %s210, %s211
      %p223 = scmp.eq.s32.totalorder %s28, 1
      %p224 = por %p222, %p223
      %p226 = scmp.ne.s32.totalorder %s211, %s225
      %p227 = scmp.eq.s32.totalorder %s28, 0
      %p228 = por %p226, %p227
      %s230 = sadd.s32 %s229, 1
      %p233 = scmp.eq.s32.totalorder %s22, 1
      %p234 = scmp.ne.s32.totalorder %s229, %s231
      %p235 = scmp.eq.s32.totalorder %s22, 0
      %p236 = por %p234, %p235
      %p237 = scmp.ne.s32.totalorder %s229, %s231
      %p238 = scmp.eq.s32.totalorder %s27, 1
      %p239 = por %p237, %p238
      %p240 = scmp.ne.s32.totalorder %s231, %s232
      %p241 = scmp.eq.s32.totalorder %s27, 0
      %p242 = por %p240, %p241
      %p243 = scmp.ne.s32.totalorder %s231, %s232
      %p244 = scmp.eq.s32.totalorder %s28, 1
      %p245 = por %p243, %p244
      %p247 = scmp.ne.s32.totalorder %s232, %s246
      %p248 = scmp.eq.s32.totalorder %s28, 0
      %p249 = por %p247, %p248
      %p250 = scmp.le.s32.totalorder 1, %s22
      %p251 = scmp.lt.s32.totalorder %s22, 3
      %p252 = pnand %p250, %p251
      %p253 = pneg %p252
      // Predicated region
      $region9: #{tpu_custom_call.1} parent=5 // pred_check
        _
      $region10: #{tpu_custom_call.1} parent=5 // pred_check_branch
        %255 = sbr.rel (%p252) target = $region12
      $region11: #{tpu_custom_call.1} parent=5 // pred_region
        %s256 = ssub.s32 %s22, 1
        // Predicated region
        $region13: #{tpu_custom_call.1} parent=11 // pred_check
          %p257 = pneg %p95
        $region14: #{tpu_custom_call.1} parent=11 // pred_check_branch
          %259 = sbr.rel (%p257) target = $region16
        $region15: #{tpu_custom_call.1} parent=11 // pred_region
          _
        $region16: #{tpu_custom_call.1} parent=11 // pred_fallthru
          _
        // Predicated region
        $region17: #{tpu_custom_call.1} parent=11 // pred_check
          %p260 = pneg %p116
        $region18: #{tpu_custom_call.1} parent=11 // pred_check_branch
          %262 = sbr.rel (%p260) target = $region20
        $region19: #{tpu_custom_call.1} parent=11 // pred_region
          _
        $region20: #{tpu_custom_call.1} parent=11 // pred_fallthru
          _
        // Predicated region
        $region21: #{tpu_custom_call.1} parent=11 // pred_check
          %p263 = pneg %p137
        $region22: #{tpu_custom_call.1} parent=11 // pred_check_branch
          %265 = sbr.rel (%p263) target = $region24
        $region23: #{tpu_custom_call.1} parent=11 // pred_region
          _
        $region24: #{tpu_custom_call.1} parent=11 // pred_fallthru
          _
        // Predicated region
        $region25: #{tpu_custom_call.1} parent=11 // pred_check
          %p266 = pneg %p158
        $region26: #{tpu_custom_call.1} parent=11 // pred_check_branch
          %268 = sbr.rel (%p266) target = $region28
        $region27: #{tpu_custom_call.1} parent=11 // pred_region
          _
        $region28: #{tpu_custom_call.1} parent=11 // pred_fallthru
          _
      $region12: #{tpu_custom_call.1} parent=5 // pred_fallthru
        _
      %p269 = scmp.lt.s32.totalorder %s22, 2
      // Predicated region
      $region29: #{tpu_custom_call.1} parent=5 // pred_check
        %p270 = pneg %p269
      $region30: #{tpu_custom_call.1} parent=5 // pred_check_branch
        %272 = sbr.rel (%p270) target = $region32
      $region31: #{tpu_custom_call.1} parent=5 // pred_region
        // Predicated region
        $region33: #{tpu_custom_call.1} parent=31 // pred_check
          %p273 = pneg %p42
        $region34: #{tpu_custom_call.1} parent=31 // pred_check_branch
          %275 = sbr.rel (%p273) target = $region36
        $region35: #{tpu_custom_call.1} parent=31 // pred_region
          %s276 = smul.u32 16, %s22
          %p277 = scmp.lt.s32.totalorder %s276, 31
          %s278 = scalar_select %p277, %s276, 31
          %s279 = smul.addr %s278, 8
          %s280 = scalar_lea.vmem %s0, %s279
          %s281 = smul.u32 16, %s22
        $region36: #{tpu_custom_call.1} parent=31 // pred_fallthru
          _
        // Predicated region
        $region37: #{tpu_custom_call.1} parent=31 // pred_check
          %p282 = pneg %p68
        $region38: #{tpu_custom_call.1} parent=31 // pred_check_branch
          %284 = sbr.rel (%p282) target = $region40
        $region39: #{tpu_custom_call.1} parent=31 // pred_region
          %s285 = sand.u32 %s58, 1
          %s286 = scalar_lea.sflag [#allocation7], %s285
          %s287 = sand.u32 %s58, 1
          %s288 = smul.addr %s287, 1024
          %s289 = scalar_lea.vmem [#allocation6], %s288
          %s290 = smul.u32 16, %s22
          %s292 = ssub.s32 16384, 16384
          %293 = vsyncadd %s286, %s292
          %s294 = smul.addr %s290, 8
          %s295 = smul.addr %s294, 128
          %s296 = scalar_lea.hbm %s1, %s295
          %s297 = sshll.u32 %s289, 4
          %s298 = int_to_ptr.vmem [resolvable:$true] %s297
          %303 = dma.hbm_to_vmem [thread:$0]  %s296, 16384, %s298, %s286, 1024, 1024, 64
        $region40: #{tpu_custom_call.1} parent=31 // pred_fallthru
          _
      $region32: #{tpu_custom_call.1} parent=5 // pred_fallthru
        _
      %p304 = scmp.le.s32.totalorder 1, %s22
      %p305 = scmp.lt.s32.totalorder %s22, 3
      %p306 = pnand %p304, %p305
      %p307 = pneg %p306
      // Predicated region
      $region41: #{tpu_custom_call.1} parent=5 // pred_check
        _
      $region42: #{tpu_custom_call.1} parent=5 // pred_check_branch
        %309 = sbr.rel (%p306) target = $region44
      $region43: #{tpu_custom_call.1} parent=5 // pred_region
        %s310 = ssub.s32 %s22, 1
        %s311 = sand.u32 %s61, 1
        %s312 = scalar_lea.sflag [#allocation7], %s311
        %s313 = sand.u32 %s61, 1
        %s314 = smul.addr %s313, 1024
        %s315 = scalar_lea.vmem [#allocation6], %s314
        // Predicated region
        $region45: #{tpu_custom_call.1} parent=43 // pred_check
          %p316 = pneg %p74
        $region46: #{tpu_custom_call.1} parent=43 // pred_check_branch
          %318 = sbr.rel (%p316) target = $region48
        $region47: #{tpu_custom_call.1} parent=43 // pred_region
          %319 = dma.done %s312, 16384
        $region48: #{tpu_custom_call.1} parent=43 // pred_fallthru
          _
        %s320 = smul.u32 16, %s27
        %p321 = scmp.lt.s32.totalorder %s320, 31
        %s322 = scalar_select %p321, %s320, 31
        %s323 = smul.addr %s322, 8
        %s324 = scalar_lea.vmem %s0, %s323
        %p325 = pneg %p48
        %p326 = pneg %p45
        %s327 = sand.u32 %s61, 1
        %s328 = scalar_lea.sflag [#allocation7], %s327
        %s329 = sand.u32 %s61, 1
        %s330 = smul.addr %s329, 1024
        %s331 = scalar_lea.vmem [#allocation6], %s330
        %p332 = pneg %p74
        %p333 = pneg %p71
        %p334 = pneg %p95
        %p335 = pneg %p92
        %p336 = pneg %p116
        %p337 = pneg %p113
        %p338 = pneg %p137
        %p339 = pneg %p134
        %p340 = pneg %p158
        %p341 = pneg %p155
        %p342 = pneg %p179
        %p343 = pneg %p176
        %p344 = pneg %p200
        %p345 = pneg %p197
        %p346 = pneg %p221
        %p347 = pneg %p218
        %p348 = pneg %p242
        %p349 = pneg %p239
        %s350 = smul.u32 16, %s27
        %p351 = scmp.lt.s32.totalorder %s350, 31
        %s352 = scalar_select %p351, %s350, 31
        %s353 = smul.addr %s352, 8
        %s354 = scalar_lea.vmem %s0, %s353
        %s355 = smul.u32 16, %s27
        %s356 = smul.u32 16, %s27
        %p357 = scmp.eq.s32.totalorder %s27, 0
        // Predicated region
        $region49: #{tpu_custom_call.1} parent=43 // pred_check
          %p358 = pneg %p357
        $region50: #{tpu_custom_call.1} parent=43 // pred_check_branch
          %360 = sbr.rel (%p358) target = $region52
        $region51: #{tpu_custom_call.1} parent=43 // pred_region
          %vm361 = vcmask 24576
          %362 = vst.msk [vmem:[#allocation2] sm:$0x1] %vm361, 0.0
          %363 = vst.msk [vmem:[#allocation3] sm:$0x1] %vm361, 0.0
          %364 = vst [vmem:[#allocation4] sm:$0xff] 0.0
          %365 = vst [vmem:[#allocation5] sm:$0xff] 0.0
        $region52: #{tpu_custom_call.1} parent=43 // pred_fallthru
          _
        %v366 = vld [vmem:[%s354] sm:$0xff]
        %v367 = vld [vmem:[%s354 + $0x8] sm:$0xff]
        %v368 = vld [vmem:[%s354 + $0x10] sm:$0xff]
        %v369 = vld [vmem:[%s354 + $0x18] sm:$0xff]
        %v370 = vld [vmem:[%s354 + $0x20] sm:$0xff]
        %v371 = vld [vmem:[%s354 + $0x28] sm:$0xff]
        %v372 = vld [vmem:[%s354 + $0x30] sm:$0xff]
        %v373 = vld [vmem:[%s354 + $0x38] sm:$0xff]
        %v374 = vld [vmem:[%s354 + $0x40] sm:$0xff]
        %v375 = vld [vmem:[%s354 + $0x48] sm:$0xff]
        %v376 = vld [vmem:[%s354 + $0x50] sm:$0xff]
        %v377 = vld [vmem:[%s354 + $0x58] sm:$0xff]
        %v378 = vld [vmem:[%s354 + $0x60] sm:$0xff]
        %v379 = vld [vmem:[%s354 + $0x68] sm:$0xff]
        %v380 = vld [vmem:[%s354 + $0x70] sm:$0xff]
        %v381 = vld [vmem:[%s354 + $0x78] sm:$0xff]
        %v382 = vld [vmem:[%s315] sm:$0xff]
        %v383 = vld [vmem:[%s315 + $0x8] sm:$0xff]
        %v384 = vld [vmem:[%s315 + $0x10] sm:$0xff]
        %v385 = vld [vmem:[%s315 + $0x18] sm:$0xff]
        %v386 = vld [vmem:[%s315 + $0x20] sm:$0xff]
        %v387 = vld [vmem:[%s315 + $0x28] sm:$0xff]
        %v388 = vld [vmem:[%s315 + $0x30] sm:$0xff]
        %v389 = vld [vmem:[%s315 + $0x38] sm:$0xff]
        %v390 = vld [vmem:[%s315 + $0x40] sm:$0xff]
        %v391 = vld [vmem:[%s315 + $0x48] sm:$0xff]
        %v392 = vld [vmem:[%s315 + $0x50] sm:$0xff]
        %v393 = vld [vmem:[%s315 + $0x58] sm:$0xff]
        %v394 = vld [vmem:[%s315 + $0x60] sm:$0xff]
        %v395 = vld [vmem:[%s315 + $0x68] sm:$0xff]
        %v396 = vld [vmem:[%s315 + $0x70] sm:$0xff]
        %v397 = vld [vmem:[%s315 + $0x78] sm:$0xff]
        %v398 = vld [vmem:[%s315 + $0x80] sm:$0xff]
        %v399 = vld [vmem:[%s315 + $0x88] sm:$0xff]
        %v400 = vld [vmem:[%s315 + $0x90] sm:$0xff]
        %v401 = vld [vmem:[%s315 + $0x98] sm:$0xff]
        %v402 = vld [vmem:[%s315 + $0xa0] sm:$0xff]
        %v403 = vld [vmem:[%s315 + $0xa8] sm:$0xff]
        %v404 = vld [vmem:[%s315 + $0xb0] sm:$0xff]
        %v405 = vld [vmem:[%s315 + $0xb8] sm:$0xff]
        %v406 = vld [vmem:[%s315 + $0xc0] sm:$0xff]
        %v407 = vld [vmem:[%s315 + $0xc8] sm:$0xff]
        %v408 = vld [vmem:[%s315 + $0xd0] sm:$0xff]
        %v409 = vld [vmem:[%s315 + $0xd8] sm:$0xff]
        %v410 = vld [vmem:[%s315 + $0xe0] sm:$0xff]
        %v411 = vld [vmem:[%s315 + $0xe8] sm:$0xff]
        %v412 = vld [vmem:[%s315 + $0xf0] sm:$0xff]
        %v413 = vld [vmem:[%s315 + $0xf8] sm:$0xff]
        %v414 = vld [vmem:[%s315 + $0x100] sm:$0xff]
        %v415 = vld [vmem:[%s315 + $0x108] sm:$0xff]
        %v416 = vld [vmem:[%s315 + $0x110] sm:$0xff]
        %v417 = vld [vmem:[%s315 + $0x118] sm:$0xff]
        %v418 = vld [vmem:[%s315 + $0x120] sm:$0xff]
        %v419 = vld [vmem:[%s315 + $0x128] sm:$0xff]
        %v420 = vld [vmem:[%s315 + $0x130] sm:$0xff]
        %v421 = vld [vmem:[%s315 + $0x138] sm:$0xff]
        %v422 = vld [vmem:[%s315 + $0x140] sm:$0xff]
        %v423 = vld [vmem:[%s315 + $0x148] sm:$0xff]
        %v424 = vld [vmem:[%s315 + $0x150] sm:$0xff]
        %v425 = vld [vmem:[%s315 + $0x158] sm:$0xff]
        %v426 = vld [vmem:[%s315 + $0x160] sm:$0xff]
        %v427 = vld [vmem:[%s315 + $0x168] sm:$0xff]
        %v428 = vld [vmem:[%s315 + $0x170] sm:$0xff]
        %v429 = vld [vmem:[%s315 + $0x178] sm:$0xff]
        %v430 = vld [vmem:[%s315 + $0x180] sm:$0xff]
        %v431 = vld [vmem:[%s315 + $0x188] sm:$0xff]
        %v432 = vld [vmem:[%s315 + $0x190] sm:$0xff]
        %v433 = vld [vmem:[%s315 + $0x198] sm:$0xff]
        %v434 = vld [vmem:[%s315 + $0x1a0] sm:$0xff]
        %v435 = vld [vmem:[%s315 + $0x1a8] sm:$0xff]
        %v436 = vld [vmem:[%s315 + $0x1b0] sm:$0xff]
        %v437 = vld [vmem:[%s315 + $0x1b8] sm:$0xff]
        %v438 = vld [vmem:[%s315 + $0x1c0] sm:$0xff]
        %v439 = vld [vmem:[%s315 + $0x1c8] sm:$0xff]
        %v440 = vld [vmem:[%s315 + $0x1d0] sm:$0xff]
        %v441 = vld [vmem:[%s315 + $0x1d8] sm:$0xff]
        %v442 = vld [vmem:[%s315 + $0x1e0] sm:$0xff]
        %v443 = vld [vmem:[%s315 + $0x1e8] sm:$0xff]
        %v444 = vld [vmem:[%s315 + $0x1f0] sm:$0xff]
        %v445 = vld [vmem:[%s315 + $0x1f8] sm:$0xff]
        %v446 = vld [vmem:[%s315 + $0x200] sm:$0xff]
        %v447 = vld [vmem:[%s315 + $0x208] sm:$0xff]
        %v448 = vld [vmem:[%s315 + $0x210] sm:$0xff]
        %v449 = vld [vmem:[%s315 + $0x218] sm:$0xff]
        %v450 = vld [vmem:[%s315 + $0x220] sm:$0xff]
        %v451 = vld [vmem:[%s315 + $0x228] sm:$0xff]
        %v452 = vld [vmem:[%s315 + $0x230] sm:$0xff]
        %v453 = vld [vmem:[%s315 + $0x238] sm:$0xff]
        %v454 = vld [vmem:[%s315 + $0x240] sm:$0xff]
        %v455 = vld [vmem:[%s315 + $0x248] sm:$0xff]
        %v456 = vld [vmem:[%s315 + $0x250] sm:$0xff]
        %v457 = vld [vmem:[%s315 + $0x258] sm:$0xff]
        %v458 = vld [vmem:[%s315 + $0x260] sm:$0xff]
        %v459 = vld [vmem:[%s315 + $0x268] sm:$0xff]
        %v460 = vld [vmem:[%s315 + $0x270] sm:$0xff]
        %v461 = vld [vmem:[%s315 + $0x278] sm:$0xff]
        %v462 = vld [vmem:[%s315 + $0x280] sm:$0xff]
        %v463 = vld [vmem:[%s315 + $0x288] sm:$0xff]
        %v464 = vld [vmem:[%s315 + $0x290] sm:$0xff]
        %v465 = vld [vmem:[%s315 + $0x298] sm:$0xff]
        %v466 = vld [vmem:[%s315 + $0x2a0] sm:$0xff]
        %v467 = vld [vmem:[%s315 + $0x2a8] sm:$0xff]
        %v468 = vld [vmem:[%s315 + $0x2b0] sm:$0xff]
        %v469 = vld [vmem:[%s315 + $0x2b8] sm:$0xff]
        %v470 = vld [vmem:[%s315 + $0x2c0] sm:$0xff]
        %v471 = vld [vmem:[%s315 + $0x2c8] sm:$0xff]
        %v472 = vld [vmem:[%s315 + $0x2d0] sm:$0xff]
        %v473 = vld [vmem:[%s315 + $0x2d8] sm:$0xff]
        %v474 = vld [vmem:[%s315 + $0x2e0] sm:$0xff]
        %v475 = vld [vmem:[%s315 + $0x2e8] sm:$0xff]
        %v476 = vld [vmem:[%s315 + $0x2f0] sm:$0xff]
        %v477 = vld [vmem:[%s315 + $0x2f8] sm:$0xff]
        %v478 = vld [vmem:[%s315 + $0x300] sm:$0xff]
        %v479 = vld [vmem:[%s315 + $0x308] sm:$0xff]
        %v480 = vld [vmem:[%s315 + $0x310] sm:$0xff]
        %v481 = vld [vmem:[%s315 + $0x318] sm:$0xff]
        %v482 = vld [vmem:[%s315 + $0x320] sm:$0xff]
        %v483 = vld [vmem:[%s315 + $0x328] sm:$0xff]
        %v484 = vld [vmem:[%s315 + $0x330] sm:$0xff]
        %v485 = vld [vmem:[%s315 + $0x338] sm:$0xff]
        %v486 = vld [vmem:[%s315 + $0x340] sm:$0xff]
        %v487 = vld [vmem:[%s315 + $0x348] sm:$0xff]
        %v488 = vld [vmem:[%s315 + $0x350] sm:$0xff]
        %v489 = vld [vmem:[%s315 + $0x358] sm:$0xff]
        %v490 = vld [vmem:[%s315 + $0x360] sm:$0xff]
        %v491 = vld [vmem:[%s315 + $0x368] sm:$0xff]
        %v492 = vld [vmem:[%s315 + $0x370] sm:$0xff]
        %v493 = vld [vmem:[%s315 + $0x378] sm:$0xff]
        %v494 = vld [vmem:[%s315 + $0x380] sm:$0xff]
        %v495 = vld [vmem:[%s315 + $0x388] sm:$0xff]
        %v496 = vld [vmem:[%s315 + $0x390] sm:$0xff]
        %v497 = vld [vmem:[%s315 + $0x398] sm:$0xff]
        %v498 = vld [vmem:[%s315 + $0x3a0] sm:$0xff]
        %v499 = vld [vmem:[%s315 + $0x3a8] sm:$0xff]
        %v500 = vld [vmem:[%s315 + $0x3b0] sm:$0xff]
        %v501 = vld [vmem:[%s315 + $0x3b8] sm:$0xff]
        %v502 = vld [vmem:[%s315 + $0x3c0] sm:$0xff]
        %v503 = vld [vmem:[%s315 + $0x3c8] sm:$0xff]
        %v504 = vld [vmem:[%s315 + $0x3d0] sm:$0xff]
        %v505 = vld [vmem:[%s315 + $0x3d8] sm:$0xff]
        %v506 = vld [vmem:[%s315 + $0x3e0] sm:$0xff]
        %v507 = vld [vmem:[%s315 + $0x3e8] sm:$0xff]
        %v508 = vld [vmem:[%s315 + $0x3f0] sm:$0xff]
        %v509 = vld [vmem:[%s315 + $0x3f8] sm:$0xff]
        %v510 = vld [vmem:[#allocation2] sm:$0x1]
        %vm511 = vcmask 31744
        %v512 = vsel %vm511, %v366, 0.0
        %v513 = vsel %vm511, %v367, 0.0
        %v514 = vadd.f32 %v512, %v513
        %v515 = vsel %vm511, %v368, 0.0
        %v516 = vadd.f32 %v514, %v515
        %v517 = vsel %vm511, %v369, 0.0
        %v518 = vadd.f32 %v516, %v517
        %v519 = vsel %vm511, %v370, 0.0
        %v520 = vadd.f32 %v518, %v519
        %v521 = vsel %vm511, %v371, 0.0
        %v522 = vadd.f32 %v520, %v521
        %v523 = vsel %vm511, %v372, 0.0
        %v524 = vadd.f32 %v522, %v523
        %v525 = vsel %vm511, %v373, 0.0
        %v526 = vadd.f32 %v524, %v525
        %v527 = vsel %vm511, %v374, 0.0
        %v528 = vadd.f32 %v526, %v527
        %v529 = vsel %vm511, %v375, 0.0
        %v530 = vadd.f32 %v528, %v529
        %v531 = vsel %vm511, %v376, 0.0
        %v532 = vadd.f32 %v530, %v531
        %v533 = vsel %vm511, %v377, 0.0
        %v534 = vadd.f32 %v532, %v533
        %v535 = vsel %vm511, %v378, 0.0
        %v536 = vadd.f32 %v534, %v535
        %v537 = vsel %vm511, %v379, 0.0
        %v538 = vadd.f32 %v536, %v537
        %v539 = vsel %vm511, %v380, 0.0
        %v540 = vadd.f32 %v538, %v539
        %v541 = vsel %vm511, %v381, 0.0
        %v542 = vadd.f32 %v540, %v541
        %v543 = vrot.slane %v542, 4
        %v544 = vadd.f32 %v542, %v543
        %v545 = vrot.slane %v544, 2
        %v546 = vadd.f32 %v544, %v545
        %v547 = vrot.slane %v546, 1
        %v548 = vadd.f32 %v546, %v547
        %v549 = vadd.f32 %v510, %v548
        %vm550 = vcmask 24576
        %551 = vst.msk [vmem:[#allocation2] sm:$0x1] %vm550, %v549
        %v552 = vld [vmem:[#allocation3] sm:$0x1]
        %v553 = vmul.f32 %v366, %v366
        %v554 = vmul.f32 %v367, %v367
        %v555 = vmul.f32 %v368, %v368
        %v556 = vmul.f32 %v369, %v369
        %v557 = vmul.f32 %v370, %v370
        %v558 = vmul.f32 %v371, %v371
        %v559 = vmul.f32 %v372, %v372
        %v560 = vmul.f32 %v373, %v373
        %v561 = vmul.f32 %v374, %v374
        %v562 = vmul.f32 %v375, %v375
        %v563 = vmul.f32 %v376, %v376
        %v564 = vmul.f32 %v377, %v377
        %v565 = vmul.f32 %v378, %v378
        %v566 = vmul.f32 %v379, %v379
        %v567 = vmul.f32 %v380, %v380
        %v568 = vmul.f32 %v381, %v381
        %v569 = vsel %vm511, %v553, 0.0
        %v570 = vsel %vm511, %v554, 0.0
        %v571 = vadd.f32 %v569, %v570
        %v572 = vsel %vm511, %v555, 0.0
        %v573 = vadd.f32 %v571, %v572
        %v574 = vsel %vm511, %v556, 0.0
        %v575 = vadd.f32 %v573, %v574
        %v576 = vsel %vm511, %v557, 0.0
        %v577 = vadd.f32 %v575, %v576
        %v578 = vsel %vm511, %v558, 0.0
        %v579 = vadd.f32 %v577, %v578
        %v580 = vsel %vm511, %v559, 0.0
        %v581 = vadd.f32 %v579, %v580
        %v582 = vsel %vm511, %v560, 0.0
        %v583 = vadd.f32 %v581, %v582
        %v584 = vsel %vm511, %v561, 0.0
        %v585 = vadd.f32 %v583, %v584
        %v586 = vsel %vm511, %v562, 0.0
        %v587 = vadd.f32 %v585, %v586
        %v588 = vsel %vm511, %v563, 0.0
        %v589 = vadd.f32 %v587, %v588
        %v590 = vsel %vm511, %v564, 0.0
        %v591 = vadd.f32 %v589, %v590
        %v592 = vsel %vm511, %v565, 0.0
        %v593 = vadd.f32 %v591, %v592
        %v594 = vsel %vm511, %v566, 0.0
        %v595 = vadd.f32 %v593, %v594
        %v596 = vsel %vm511, %v567, 0.0
        %v597 = vadd.f32 %v595, %v596
        %v598 = vsel %vm511, %v568, 0.0
        %v599 = vadd.f32 %v597, %v598
        %v600 = vrot.slane %v599, 4
        %v601 = vadd.f32 %v599, %v600
        %v602 = vrot.slane %v601, 2
        %v603 = vadd.f32 %v601, %v602
        %v604 = vrot.slane %v603, 1
        %v605 = vadd.f32 %v603, %v604
        %v606 = vadd.f32 %v552, %v605
        %607 = vst.msk [vmem:[#allocation3] sm:$0x1] %vm550, %v606
        %v608 = vld [vmem:[#allocation4] sm:$0xff]
        %v609 = vadd.f32 %v382, %v390
        %v610 = vadd.f32 %v609, %v398
        %v611 = vadd.f32 %v610, %v406
        %v612 = vadd.f32 %v611, %v414
        %v613 = vadd.f32 %v612, %v422
        %v614 = vadd.f32 %v613, %v430
        %v615 = vadd.f32 %v614, %v438
        %v616 = vadd.f32 %v615, %v446
        %v617 = vadd.f32 %v616, %v454
        %v618 = vadd.f32 %v617, %v462
        %v619 = vadd.f32 %v618, %v470
        %v620 = vadd.f32 %v619, %v478
        %v621 = vadd.f32 %v620, %v486
        %v622 = vadd.f32 %v621, %v494
        %v623 = vadd.f32 %v622, %v502
        %v624 = vrot.slane %v623, 4
        %v625 = vadd.f32 %v623, %v624
        %v626 = vrot.slane %v625, 2
        %v627 = vadd.f32 %v625, %v626
        %v628 = vrot.slane %v627, 1
        %v629 = vadd.f32 %v627, %v628
        %v630 = vadd.f32 %v383, %v391
        %v631 = vadd.f32 %v630, %v399
        %v632 = vadd.f32 %v631, %v407
        %v633 = vadd.f32 %v632, %v415
        %v634 = vadd.f32 %v633, %v423
        %v635 = vadd.f32 %v634, %v431
        %v636 = vadd.f32 %v635, %v439
        %v637 = vadd.f32 %v636, %v447
        %v638 = vadd.f32 %v637, %v455
        %v639 = vadd.f32 %v638, %v463
        %v640 = vadd.f32 %v639, %v471
        %v641 = vadd.f32 %v640, %v479
        %v642 = vadd.f32 %v641, %v487
        %v643 = vadd.f32 %v642, %v495
        %v644 = vadd.f32 %v643, %v503
        %v645 = vrot.slane %v644, 4
        %v646 = vadd.f32 %v644, %v645
        %v647 = vrot.slane %v646, 2
        %v648 = vadd.f32 %v646, %v647
        %v649 = vrot.slane %v648, 1
        %v650 = vadd.f32 %v648, %v649
        %v651 = vadd.f32 %v384, %v392
        %v652 = vadd.f32 %v651, %v400
        %v653 = vadd.f32 %v652, %v408
        %v654 = vadd.f32 %v653, %v416
        %v655 = vadd.f32 %v654, %v424
        %v656 = vadd.f32 %v655, %v432
        %v657 = vadd.f32 %v656, %v440
        %v658 = vadd.f32 %v657, %v448
        %v659 = vadd.f32 %v658, %v456
        %v660 = vadd.f32 %v659, %v464
        %v661 = vadd.f32 %v660, %v472
        %v662 = vadd.f32 %v661, %v480
        %v663 = vadd.f32 %v662, %v488
        %v664 = vadd.f32 %v663, %v496
        %v665 = vadd.f32 %v664, %v504
        %v666 = vrot.slane %v665, 4
        %v667 = vadd.f32 %v665, %v666
        %v668 = vrot.slane %v667, 2
        %v669 = vadd.f32 %v667, %v668
        %v670 = vrot.slane %v669, 1
        %v671 = vadd.f32 %v669, %v670
        %v672 = vadd.f32 %v385, %v393
        %v673 = vadd.f32 %v672, %v401
        %v674 = vadd.f32 %v673, %v409
        %v675 = vadd.f32 %v674, %v417
        %v676 = vadd.f32 %v675, %v425
        %v677 = vadd.f32 %v676, %v433
        %v678 = vadd.f32 %v677, %v441
        %v679 = vadd.f32 %v678, %v449
        %v680 = vadd.f32 %v679, %v457
        %v681 = vadd.f32 %v680, %v465
        %v682 = vadd.f32 %v681, %v473
        %v683 = vadd.f32 %v682, %v481
        %v684 = vadd.f32 %v683, %v489
        %v685 = vadd.f32 %v684, %v497
        %v686 = vadd.f32 %v685, %v505
        %v687 = vrot.slane %v686, 4
        %v688 = vadd.f32 %v686, %v687
        %v689 = vrot.slane %v688, 2
        %v690 = vadd.f32 %v688, %v689
        %v691 = vrot.slane %v690, 1
        %v692 = vadd.f32 %v690, %v691
        %v693 = vadd.f32 %v386, %v394
        %v694 = vadd.f32 %v693, %v402
        %v695 = vadd.f32 %v694, %v410
        %v696 = vadd.f32 %v695, %v418
        %v697 = vadd.f32 %v696, %v426
        %v698 = vadd.f32 %v697, %v434
        %v699 = vadd.f32 %v698, %v442
        %v700 = vadd.f32 %v699, %v450
        %v701 = vadd.f32 %v700, %v458
        %v702 = vadd.f32 %v701, %v466
        %v703 = vadd.f32 %v702, %v474
        %v704 = vadd.f32 %v703, %v482
        %v705 = vadd.f32 %v704, %v490
        %v706 = vadd.f32 %v705, %v498
        %v707 = vadd.f32 %v706, %v506
        %v708 = vrot.slane %v707, 4
        %v709 = vadd.f32 %v707, %v708
        %v710 = vrot.slane %v709, 2
        %v711 = vadd.f32 %v709, %v710
        %v712 = vrot.slane %v711, 1
        %v713 = vadd.f32 %v711, %v712
        %v714 = vadd.f32 %v387, %v395
        %v715 = vadd.f32 %v714, %v403
        %v716 = vadd.f32 %v715, %v411
        %v717 = vadd.f32 %v716, %v419
        %v718 = vadd.f32 %v717, %v427
        %v719 = vadd.f32 %v718, %v435
        %v720 = vadd.f32 %v719, %v443
        %v721 = vadd.f32 %v720, %v451
        %v722 = vadd.f32 %v721, %v459
        %v723 = vadd.f32 %v722, %v467
        %v724 = vadd.f32 %v723, %v475
        %v725 = vadd.f32 %v724, %v483
        %v726 = vadd.f32 %v725, %v491
        %v727 = vadd.f32 %v726, %v499
        %v728 = vadd.f32 %v727, %v507
        %v729 = vrot.slane %v728, 4
        %v730 = vadd.f32 %v728, %v729
        %v731 = vrot.slane %v730, 2
        %v732 = vadd.f32 %v730, %v731
        %v733 = vrot.slane %v732, 1
        %v734 = vadd.f32 %v732, %v733
        %v735 = vadd.f32 %v388, %v396
        %v736 = vadd.f32 %v735, %v404
        %v737 = vadd.f32 %v736, %v412
        %v738 = vadd.f32 %v737, %v420
        %v739 = vadd.f32 %v738, %v428
        %v740 = vadd.f32 %v739, %v436
        %v741 = vadd.f32 %v740, %v444
        %v742 = vadd.f32 %v741, %v452
        %v743 = vadd.f32 %v742, %v460
        %v744 = vadd.f32 %v743, %v468
        %v745 = vadd.f32 %v744, %v476
        %v746 = vadd.f32 %v745, %v484
        %v747 = vadd.f32 %v746, %v492
        %v748 = vadd.f32 %v747, %v500
        %v749 = vadd.f32 %v748, %v508
        %v750 = vrot.slane %v749, 4
        %v751 = vadd.f32 %v749, %v750
        %v752 = vrot.slane %v751, 2
        %v753 = vadd.f32 %v751, %v752
        %v754 = vrot.slane %v753, 1
        %v755 = vadd.f32 %v753, %v754
        %v756 = vadd.f32 %v389, %v397
        %v757 = vadd.f32 %v756, %v405
        %v758 = vadd.f32 %v757, %v413
        %v759 = vadd.f32 %v758, %v421
        %v760 = vadd.f32 %v759, %v429
        %v761 = vadd.f32 %v760, %v437
        %v762 = vadd.f32 %v761, %v445
        %v763 = vadd.f32 %v762, %v453
        %v764 = vadd.f32 %v763, %v461
        %v765 = vadd.f32 %v764, %v469
        %v766 = vadd.f32 %v765, %v477
        %v767 = vadd.f32 %v766, %v485
        %v768 = vadd.f32 %v767, %v493
        %v769 = vadd.f32 %v768, %v501
        %v770 = vadd.f32 %v769, %v509
        %v771 = vrot.slane %v770, 4
        %v772 = vadd.f32 %v770, %v771
        %v773 = vrot.slane %v772, 2
        %v774 = vadd.f32 %v772, %v773
        %v775 = vrot.slane %v774, 1
        %v776 = vadd.f32 %v774, %v775
        %v785 = vcombine.low %v629, %v650
        %v786 = vcombine.low %v671, %v692
        %v787 = vcombine.low %v713, %v734
        %v788 = vcombine.low %v755, %v776
        %v790 = vunpack.c.l.s4 1966171168
        %v791 = vunpack.c.0.s8 %v790
        %v792 = vlaneseq
        %v793 = vshrl.u32 %v792, 7
        %v794 = vsub.s32 %v791, %v793
        %v795 = vrot.slane %v785, %v794
        %v797 = vunpack.c.l.s4 1966171168
        %v798 = vunpack.c.0.s8 %v797
        %v799 = vlaneseq
        %v800 = vshrl.u32 %v799, 7
        %v801 = vsub.s32 %v798, %v800
        %v802 = vrot.slane %v786, %v801
        %v804 = vunpack.c.l.s4 1966171168
        %v805 = vunpack.c.0.s8 %v804
        %v806 = vlaneseq
        %v807 = vshrl.u32 %v806, 7
        %v808 = vsub.s32 %v805, %v807
        %v809 = vrot.slane %v787, %v808
        %v811 = vunpack.c.l.s4 1966171168
        %v812 = vunpack.c.0.s8 %v811
        %v813 = vlaneseq
        %v814 = vshrl.u32 %v813, 7
        %v815 = vsub.s32 %v812, %v814
        %v816 = vrot.slane %v788, %v815
        %v817 = vcombine.low %v795, %v802
        %v818 = vcombine.low %v809, %v816
        %v820 = vunpack.c.l.s4 1966171168
        %v821 = vunpack.c.0.s8 %v820
        %v822 = vlaneseq
        %v823 = vshrl.u32 %v822, 7
        %v824 = vsub.s32 %v821, %v823
        %v825 = vrot.slane %v817, %v824
        %v827 = vunpack.c.l.s4 1966171168
        %v828 = vunpack.c.0.s8 %v827
        %v829 = vlaneseq
        %v830 = vshrl.u32 %v829, 7
        %v831 = vsub.s32 %v828, %v830
        %v832 = vrot.slane %v818, %v831
        %v833 = vcombine.low %v825, %v832
        %v835 = vadd.f32 %v608, %v833
        %836 = vst [vmem:[#allocation4] sm:$0xff] %v835
        %v837 = vld [vmem:[#allocation5] sm:$0xff]
        %v838 = vmul.f32 %v382, %v382
        %v839 = vmul.f32 %v383, %v383
        %v840 = vmul.f32 %v384, %v384
        %v841 = vmul.f32 %v385, %v385
        %v842 = vmul.f32 %v386, %v386
        %v843 = vmul.f32 %v387, %v387
        %v844 = vmul.f32 %v388, %v388
        %v845 = vmul.f32 %v389, %v389
        %v846 = vmul.f32 %v390, %v390
        %v847 = vmul.f32 %v391, %v391
        %v848 = vmul.f32 %v392, %v392
        %v849 = vmul.f32 %v393, %v393
        %v850 = vmul.f32 %v394, %v394
        %v851 = vmul.f32 %v395, %v395
        %v852 = vmul.f32 %v396, %v396
        %v853 = vmul.f32 %v397, %v397
        %v854 = vmul.f32 %v398, %v398
        %v855 = vmul.f32 %v399, %v399
        %v856 = vmul.f32 %v400, %v400
        %v857 = vmul.f32 %v401, %v401
        %v858 = vmul.f32 %v402, %v402
        %v859 = vmul.f32 %v403, %v403
        %v860 = vmul.f32 %v404, %v404
        %v861 = vmul.f32 %v405, %v405
        %v862 = vmul.f32 %v406, %v406
        %v863 = vmul.f32 %v407, %v407
        %v864 = vmul.f32 %v408, %v408
        %v865 = vmul.f32 %v409, %v409
        %v866 = vmul.f32 %v410, %v410
        %v867 = vmul.f32 %v411, %v411
        %v868 = vmul.f32 %v412, %v412
        %v869 = vmul.f32 %v413, %v413
        %v870 = vmul.f32 %v414, %v414
        %v871 = vmul.f32 %v415, %v415
        %v872 = vmul.f32 %v416, %v416
        %v873 = vmul.f32 %v417, %v417
        %v874 = vmul.f32 %v418, %v418
        %v875 = vmul.f32 %v419, %v419
        %v876 = vmul.f32 %v420, %v420
        %v877 = vmul.f32 %v421, %v421
        %v878 = vmul.f32 %v422, %v422
        %v879 = vmul.f32 %v423, %v423
        %v880 = vmul.f32 %v424, %v424
        %v881 = vmul.f32 %v425, %v425
        %v882 = vmul.f32 %v426, %v426
        %v883 = vmul.f32 %v427, %v427
        %v884 = vmul.f32 %v428, %v428
        %v885 = vmul.f32 %v429, %v429
        %v886 = vmul.f32 %v430, %v430
        %v887 = vmul.f32 %v431, %v431
        %v888 = vmul.f32 %v432, %v432
        %v889 = vmul.f32 %v433, %v433
        %v890 = vmul.f32 %v434, %v434
        %v891 = vmul.f32 %v435, %v435
        %v892 = vmul.f32 %v436, %v436
        %v893 = vmul.f32 %v437, %v437
        %v894 = vmul.f32 %v438, %v438
        %v895 = vmul.f32 %v439, %v439
        %v896 = vmul.f32 %v440, %v440
        %v897 = vmul.f32 %v441, %v441
        %v898 = vmul.f32 %v442, %v442
        %v899 = vmul.f32 %v443, %v443
        %v900 = vmul.f32 %v444, %v444
        %v901 = vmul.f32 %v445, %v445
        %v902 = vmul.f32 %v446, %v446
        %v903 = vmul.f32 %v447, %v447
        %v904 = vmul.f32 %v448, %v448
        %v905 = vmul.f32 %v449, %v449
        %v906 = vmul.f32 %v450, %v450
        %v907 = vmul.f32 %v451, %v451
        %v908 = vmul.f32 %v452, %v452
        %v909 = vmul.f32 %v453, %v453
        %v910 = vmul.f32 %v454, %v454
        %v911 = vmul.f32 %v455, %v455
        %v912 = vmul.f32 %v456, %v456
        %v913 = vmul.f32 %v457, %v457
        %v914 = vmul.f32 %v458, %v458
        %v915 = vmul.f32 %v459, %v459
        %v916 = vmul.f32 %v460, %v460
        %v917 = vmul.f32 %v461, %v461
        %v918 = vmul.f32 %v462, %v462
        %v919 = vmul.f32 %v463, %v463
        %v920 = vmul.f32 %v464, %v464
        %v921 = vmul.f32 %v465, %v465
        %v922 = vmul.f32 %v466, %v466
        %v923 = vmul.f32 %v467, %v467
        %v924 = vmul.f32 %v468, %v468
        %v925 = vmul.f32 %v469, %v469
        %v926 = vmul.f32 %v470, %v470
        %v927 = vmul.f32 %v471, %v471
        %v928 = vmul.f32 %v472, %v472
        %v929 = vmul.f32 %v473, %v473
        %v930 = vmul.f32 %v474, %v474
        %v931 = vmul.f32 %v475, %v475
        %v932 = vmul.f32 %v476, %v476
        %v933 = vmul.f32 %v477, %v477
        %v934 = vmul.f32 %v478, %v478
        %v935 = vmul.f32 %v479, %v479
        %v936 = vmul.f32 %v480, %v480
        %v937 = vmul.f32 %v481, %v481
        %v938 = vmul.f32 %v482, %v482
        %v939 = vmul.f32 %v483, %v483
        %v940 = vmul.f32 %v484, %v484
        %v941 = vmul.f32 %v485, %v485
        %v942 = vmul.f32 %v486, %v486
        %v943 = vmul.f32 %v487, %v487
        %v944 = vmul.f32 %v488, %v488
        %v945 = vmul.f32 %v489, %v489
        %v946 = vmul.f32 %v490, %v490
        %v947 = vmul.f32 %v491, %v491
        %v948 = vmul.f32 %v492, %v492
        %v949 = vmul.f32 %v493, %v493
        %v950 = vmul.f32 %v494, %v494
        %v951 = vmul.f32 %v495, %v495
        %v952 = vmul.f32 %v496, %v496
        %v953 = vmul.f32 %v497, %v497
        %v954 = vmul.f32 %v498, %v498
        %v955 = vmul.f32 %v499, %v499
        %v956 = vmul.f32 %v500, %v500
        %v957 = vmul.f32 %v501, %v501
        %v958 = vmul.f32 %v502, %v502
        %v959 = vmul.f32 %v503, %v503
        %v960 = vmul.f32 %v504, %v504
        %v961 = vmul.f32 %v505, %v505
        %v962 = vmul.f32 %v506, %v506
        %v963 = vmul.f32 %v507, %v507
        %v964 = vmul.f32 %v508, %v508
        %v965 = vmul.f32 %v509, %v509
        %v966 = vadd.f32 %v838, %v846
        %v967 = vadd.f32 %v966, %v854
        %v968 = vadd.f32 %v967, %v862
        %v969 = vadd.f32 %v968, %v870
        %v970 = vadd.f32 %v969, %v878
        %v971 = vadd.f32 %v970, %v886
        %v972 = vadd.f32 %v971, %v894
        %v973 = vadd.f32 %v972, %v902
        %v974 = vadd.f32 %v973, %v910
        %v975 = vadd.f32 %v974, %v918
        %v976 = vadd.f32 %v975, %v926
        %v977 = vadd.f32 %v976, %v934
        %v978 = vadd.f32 %v977, %v942
        %v979 = vadd.f32 %v978, %v950
        %v980 = vadd.f32 %v979, %v958
        %v981 = vrot.slane %v980, 4
        %v982 = vadd.f32 %v980, %v981
        %v983 = vrot.slane %v982, 2
        %v984 = vadd.f32 %v982, %v983
        %v985 = vrot.slane %v984, 1
        %v986 = vadd.f32 %v984, %v985
        %v987 = vadd.f32 %v839, %v847
        %v988 = vadd.f32 %v987, %v855
        %v989 = vadd.f32 %v988, %v863
        %v990 = vadd.f32 %v989, %v871
        %v991 = vadd.f32 %v990, %v879
        %v992 = vadd.f32 %v991, %v887
        %v993 = vadd.f32 %v992, %v895
        %v994 = vadd.f32 %v993, %v903
        %v995 = vadd.f32 %v994, %v911
        %v996 = vadd.f32 %v995, %v919
        %v997 = vadd.f32 %v996, %v927
        %v998 = vadd.f32 %v997, %v935
        %v999 = vadd.f32 %v998, %v943
        %v1000 = vadd.f32 %v999, %v951
        %v1001 = vadd.f32 %v1000, %v959
        %v1002 = vrot.slane %v1001, 4
        %v1003 = vadd.f32 %v1001, %v1002
        %v1004 = vrot.slane %v1003, 2
        %v1005 = vadd.f32 %v1003, %v1004
        %v1006 = vrot.slane %v1005, 1
        %v1007 = vadd.f32 %v1005, %v1006
        %v1008 = vadd.f32 %v840, %v848
        %v1009 = vadd.f32 %v1008, %v856
        %v1010 = vadd.f32 %v1009, %v864
        %v1011 = vadd.f32 %v1010, %v872
        %v1012 = vadd.f32 %v1011, %v880
        %v1013 = vadd.f32 %v1012, %v888
        %v1014 = vadd.f32 %v1013, %v896
        %v1015 = vadd.f32 %v1014, %v904
        %v1016 = vadd.f32 %v1015, %v912
        %v1017 = vadd.f32 %v1016, %v920
        %v1018 = vadd.f32 %v1017, %v928
        %v1019 = vadd.f32 %v1018, %v936
        %v1020 = vadd.f32 %v1019, %v944
        %v1021 = vadd.f32 %v1020, %v952
        %v1022 = vadd.f32 %v1021, %v960
        %v1023 = vrot.slane %v1022, 4
        %v1024 = vadd.f32 %v1022, %v1023
        %v1025 = vrot.slane %v1024, 2
        %v1026 = vadd.f32 %v1024, %v1025
        %v1027 = vrot.slane %v1026, 1
        %v1028 = vadd.f32 %v1026, %v1027
        %v1029 = vadd.f32 %v841, %v849
        %v1030 = vadd.f32 %v1029, %v857
        %v1031 = vadd.f32 %v1030, %v865
        %v1032 = vadd.f32 %v1031, %v873
        %v1033 = vadd.f32 %v1032, %v881
        %v1034 = vadd.f32 %v1033, %v889
        %v1035 = vadd.f32 %v1034, %v897
        %v1036 = vadd.f32 %v1035, %v905
        %v1037 = vadd.f32 %v1036, %v913
        %v1038 = vadd.f32 %v1037, %v921
        %v1039 = vadd.f32 %v1038, %v929
        %v1040 = vadd.f32 %v1039, %v937
        %v1041 = vadd.f32 %v1040, %v945
        %v1042 = vadd.f32 %v1041, %v953
        %v1043 = vadd.f32 %v1042, %v961
        %v1044 = vrot.slane %v1043, 4
        %v1045 = vadd.f32 %v1043, %v1044
        %v1046 = vrot.slane %v1045, 2
        %v1047 = vadd.f32 %v1045, %v1046
        %v1048 = vrot.slane %v1047, 1
        %v1049 = vadd.f32 %v1047, %v1048
        %v1050 = vadd.f32 %v842, %v850
        %v1051 = vadd.f32 %v1050, %v858
        %v1052 = vadd.f32 %v1051, %v866
        %v1053 = vadd.f32 %v1052, %v874
        %v1054 = vadd.f32 %v1053, %v882
        %v1055 = vadd.f32 %v1054, %v890
        %v1056 = vadd.f32 %v1055, %v898
        %v1057 = vadd.f32 %v1056, %v906
        %v1058 = vadd.f32 %v1057, %v914
        %v1059 = vadd.f32 %v1058, %v922
        %v1060 = vadd.f32 %v1059, %v930
        %v1061 = vadd.f32 %v1060, %v938
        %v1062 = vadd.f32 %v1061, %v946
        %v1063 = vadd.f32 %v1062, %v954
        %v1064 = vadd.f32 %v1063, %v962
        %v1065 = vrot.slane %v1064, 4
        %v1066 = vadd.f32 %v1064, %v1065
        %v1067 = vrot.slane %v1066, 2
        %v1068 = vadd.f32 %v1066, %v1067
        %v1069 = vrot.slane %v1068, 1
        %v1070 = vadd.f32 %v1068, %v1069
        %v1071 = vadd.f32 %v843, %v851
        %v1072 = vadd.f32 %v1071, %v859
        %v1073 = vadd.f32 %v1072, %v867
        %v1074 = vadd.f32 %v1073, %v875
        %v1075 = vadd.f32 %v1074, %v883
        %v1076 = vadd.f32 %v1075, %v891
        %v1077 = vadd.f32 %v1076, %v899
        %v1078 = vadd.f32 %v1077, %v907
        %v1079 = vadd.f32 %v1078, %v915
        %v1080 = vadd.f32 %v1079, %v923
        %v1081 = vadd.f32 %v1080, %v931
        %v1082 = vadd.f32 %v1081, %v939
        %v1083 = vadd.f32 %v1082, %v947
        %v1084 = vadd.f32 %v1083, %v955
        %v1085 = vadd.f32 %v1084, %v963
        %v1086 = vrot.slane %v1085, 4
        %v1087 = vadd.f32 %v1085, %v1086
        %v1088 = vrot.slane %v1087, 2
        %v1089 = vadd.f32 %v1087, %v1088
        %v1090 = vrot.slane %v1089, 1
        %v1091 = vadd.f32 %v1089, %v1090
        %v1092 = vadd.f32 %v844, %v852
        %v1093 = vadd.f32 %v1092, %v860
        %v1094 = vadd.f32 %v1093, %v868
        %v1095 = vadd.f32 %v1094, %v876
        %v1096 = vadd.f32 %v1095, %v884
        %v1097 = vadd.f32 %v1096, %v892
        %v1098 = vadd.f32 %v1097, %v900
        %v1099 = vadd.f32 %v1098, %v908
        %v1100 = vadd.f32 %v1099, %v916
        %v1101 = vadd.f32 %v1100, %v924
        %v1102 = vadd.f32 %v1101, %v932
        %v1103 = vadd.f32 %v1102, %v940
        %v1104 = vadd.f32 %v1103, %v948
        %v1105 = vadd.f32 %v1104, %v956
        %v1106 = vadd.f32 %v1105, %v964
        %v1107 = vrot.slane %v1106, 4
        %v1108 = vadd.f32 %v1106, %v1107
        %v1109 = vrot.slane %v1108, 2
        %v1110 = vadd.f32 %v1108, %v1109
        %v1111 = vrot.slane %v1110, 1
        %v1112 = vadd.f32 %v1110, %v1111
        %v1113 = vadd.f32 %v845, %v853
        %v1114 = vadd.f32 %v1113, %v861
        %v1115 = vadd.f32 %v1114, %v869
        %v1116 = vadd.f32 %v1115, %v877
        %v1117 = vadd.f32 %v1116, %v885
        %v1118 = vadd.f32 %v1117, %v893
        %v1119 = vadd.f32 %v1118, %v901
        %v1120 = vadd.f32 %v1119, %v909
        %v1121 = vadd.f32 %v1120, %v917
        %v1122 = vadd.f32 %v1121, %v925
        %v1123 = vadd.f32 %v1122, %v933
        %v1124 = vadd.f32 %v1123, %v941
        %v1125 = vadd.f32 %v1124, %v949
        %v1126 = vadd.f32 %v1125, %v957
        %v1127 = vadd.f32 %v1126, %v965
        %v1128 = vrot.slane %v1127, 4
        %v1129 = vadd.f32 %v1127, %v1128
        %v1130 = vrot.slane %v1129, 2
        %v1131 = vadd.f32 %v1129, %v1130
        %v1132 = vrot.slane %v1131, 1
        %v1133 = vadd.f32 %v1131, %v1132
        %v1142 = vcombine.low %v986, %v1007
        %v1143 = vcombine.low %v1028, %v1049
        %v1144 = vcombine.low %v1070, %v1091
        %v1145 = vcombine.low %v1112, %v1133
        %v1147 = vunpack.c.l.s4 1966171168
        %v1148 = vunpack.c.0.s8 %v1147
        %v1149 = vlaneseq
        %v1150 = vshrl.u32 %v1149, 7
        %v1151 = vsub.s32 %v1148, %v1150
        %v1152 = vrot.slane %v1142, %v1151
        %v1154 = vunpack.c.l.s4 1966171168
        %v1155 = vunpack.c.0.s8 %v1154
        %v1156 = vlaneseq
        %v1157 = vshrl.u32 %v1156, 7
        %v1158 = vsub.s32 %v1155, %v1157
        %v1159 = vrot.slane %v1143, %v1158
        %v1161 = vunpack.c.l.s4 1966171168
        %v1162 = vunpack.c.0.s8 %v1161
        %v1163 = vlaneseq
        %v1164 = vshrl.u32 %v1163, 7
        %v1165 = vsub.s32 %v1162, %v1164
        %v1166 = vrot.slane %v1144, %v1165
        %v1168 = vunpack.c.l.s4 1966171168
        %v1169 = vunpack.c.0.s8 %v1168
        %v1170 = vlaneseq
        %v1171 = vshrl.u32 %v1170, 7
        %v1172 = vsub.s32 %v1169, %v1171
        %v1173 = vrot.slane %v1145, %v1172
        %v1174 = vcombine.low %v1152, %v1159
        %v1175 = vcombine.low %v1166, %v1173
        %v1177 = vunpack.c.l.s4 1966171168
        %v1178 = vunpack.c.0.s8 %v1177
        %v1179 = vlaneseq
        %v1180 = vshrl.u32 %v1179, 7
        %v1181 = vsub.s32 %v1178, %v1180
        %v1182 = vrot.slane %v1174, %v1181
        %v1184 = vunpack.c.l.s4 1966171168
        %v1185 = vunpack.c.0.s8 %v1184
        %v1186 = vlaneseq
        %v1187 = vshrl.u32 %v1186, 7
        %v1188 = vsub.s32 %v1185, %v1187
        %v1189 = vrot.slane %v1175, %v1188
        %v1190 = vcombine.low %v1182, %v1189
        %v1192 = vadd.f32 %v837, %v1190
        %1193 = vst [vmem:[#allocation5] sm:$0xff] %v1192
        %p1194 = scmp.eq.s32.totalorder %s27, 1
        // Predicated region
        $region53: #{tpu_custom_call.1} parent=43 // pred_check
          %p1195 = pneg %p1194
        $region54: #{tpu_custom_call.1} parent=43 // pred_check_branch
          %1197 = sbr.rel (%p1195) target = $region56
        $region55: #{tpu_custom_call.1} parent=43 // pred_region
          %v1198 = vld [vmem:[#allocation2] sm:$0x1]
          %v1199 = vld [vmem:[#allocation3] sm:$0x1]
          %v1200 = vld [vmem:[%s2] sm:$0x1]
          %v1201 = vld [vmem:[%s3] sm:$0x1]
          %v1202 = vmul.f32 %v1198, 0.00390625
          %v1203 = vmul.f32 %v1199, 0.00390625
          %v1204 = vmul.f32 %v1202, %v1202
          %v1205 = vsub.f32 %v1203, %v1204
          %v1206 = vadd.f32 %v1205, 1e-05
          %v1207 = vrsqrt.pop %v1206
          %v1208 = vmul.f32 %v1200, %v1207
          %v1209 = vmul.f32 %v1202, %v1208
          %v1210 = vsub.f32 %v1201, %v1209
          %1211 = vst.msk [vmem:[#allocation9] sm:$0x1] %vm550, %v1208
          %1212 = vst.msk [vmem:[#allocation10] sm:$0x1] %vm550, %v1210
          %v1213 = vld [vmem:[#allocation4] sm:$0xff]
          %v1214 = vld [vmem:[#allocation5] sm:$0xff]
          %v1215 = vld [vmem:[%s4] sm:$0xff]
          %v1216 = vld [vmem:[%s5] sm:$0xff]
          %v1217 = vmul.f32 %v1213, 0.00390625
          %v1218 = vmul.f32 %v1214, 0.00390625
          %v1219 = vmul.f32 %v1217, %v1217
          %v1220 = vsub.f32 %v1218, %v1219
          %v1221 = vadd.f32 %v1220, 1e-05
          %v1222 = vrsqrt.pop %v1221
          %v1223 = vmul.f32 %v1215, %v1222
          %v1224 = vmul.f32 %v1217, %v1223
          %v1225 = vsub.f32 %v1216, %v1224
          %1226 = vst [vmem:[#allocation12] sm:$0xff] %v1223
          %1227 = vst [vmem:[#allocation13] sm:$0xff] %v1225
        $region56: #{tpu_custom_call.1} parent=43 // pred_fallthru
          _
        // Predicated region
        $region57: #{tpu_custom_call.1} parent=43 // pred_check
          %p1228 = pneg %p176
        $region58: #{tpu_custom_call.1} parent=43 // pred_check_branch
          %1230 = sbr.rel (%p1228) target = $region60
        $region59: #{tpu_custom_call.1} parent=43 // pred_region
          %s1232 = ssub.s32 16, 16
          %1233 = vsyncadd [#allocation8], %s1232
          %s1235 = sshll.u32 [#allocation9], 4
          %s1236 = int_to_ptr.vmem [resolvable:$true] %s1235
          %1238 = dma.vmem_to_hbm [thread:$0]  %s1236, 16, %s6, [#allocation8]
        $region60: #{tpu_custom_call.1} parent=43 // pred_fallthru
          _
        // Predicated region
        $region61: #{tpu_custom_call.1} parent=43 // pred_check
          %p1239 = pneg %p197
        $region62: #{tpu_custom_call.1} parent=43 // pred_check_branch
          %1241 = sbr.rel (%p1239) target = $region64
        $region63: #{tpu_custom_call.1} parent=43 // pred_region
          %s1243 = ssub.s32 16, 16
          %1244 = vsyncadd [#allocation11], %s1243
          %s1246 = sshll.u32 [#allocation10], 4
          %s1247 = int_to_ptr.vmem [resolvable:$true] %s1246
          %1249 = dma.vmem_to_hbm [thread:$0]  %s1247, 16, %s7, [#allocation11]
        $region64: #{tpu_custom_call.1} parent=43 // pred_fallthru
          _
        // Predicated region
        $region65: #{tpu_custom_call.1} parent=43 // pred_check
          %p1250 = pneg %p218
        $region66: #{tpu_custom_call.1} parent=43 // pred_check_branch
          %1252 = sbr.rel (%p1250) target = $region68
        $region67: #{tpu_custom_call.1} parent=43 // pred_region
          %s1254 = ssub.s32 128, 128
          %1255 = vsyncadd [#allocation11], %s1254
          %s1257 = sshll.u32 [#allocation12], 4
          %s1258 = int_to_ptr.vmem [resolvable:$true] %s1257
          %1260 = dma.vmem_to_hbm [thread:$0]  %s1258, 128, %s8, [#allocation11]
        $region68: #{tpu_custom_call.1} parent=43 // pred_fallthru
          _
        // Predicated region
        $region69: #{tpu_custom_call.1} parent=43 // pred_check
          %p1261 = pneg %p239
        $region70: #{tpu_custom_call.1} parent=43 // pred_check_branch
          %1263 = sbr.rel (%p1261) target = $region72
        $region71: #{tpu_custom_call.1} parent=43 // pred_region
          %s1265 = ssub.s32 128, 128
          %1266 = vsyncadd [#allocation14], %s1265
          %s1268 = sshll.u32 [#allocation13], 4
          %s1269 = int_to_ptr.vmem [resolvable:$true] %s1268
          %1271 = dma.vmem_to_hbm [thread:$0]  %s1269, 128, %s9, [#allocation14]
        $region72: #{tpu_custom_call.1} parent=43 // pred_fallthru
          _
        // Predicated region
        $region73: #{tpu_custom_call.1} parent=43 // pred_check
          %p1272 = pneg %p176
        $region74: #{tpu_custom_call.1} parent=43 // pred_check_branch
          %1274 = sbr.rel (%p1272) target = $region76
        $region75: #{tpu_custom_call.1} parent=43 // pred_region
          %1275 = dma.done [#allocation8], 16
        $region76: #{tpu_custom_call.1} parent=43 // pred_fallthru
          _
        // Predicated region
        $region77: #{tpu_custom_call.1} parent=43 // pred_check
          %p1276 = pneg %p197
        $region78: #{tpu_custom_call.1} parent=43 // pred_check_branch
          %1278 = sbr.rel (%p1276) target = $region80
        $region79: #{tpu_custom_call.1} parent=43 // pred_region
          %1279 = dma.done [#allocation11], 16
        $region80: #{tpu_custom_call.1} parent=43 // pred_fallthru
          _
        // Predicated region
        $region81: #{tpu_custom_call.1} parent=43 // pred_check
          %p1280 = pneg %p218
        $region82: #{tpu_custom_call.1} parent=43 // pred_check_branch
          %1282 = sbr.rel (%p1280) target = $region84
        $region83: #{tpu_custom_call.1} parent=43 // pred_region
          %1283 = dma.done [#allocation11], 128
        $region84: #{tpu_custom_call.1} parent=43 // pred_fallthru
          _
        // Predicated region
        $region85: #{tpu_custom_call.1} parent=43 // pred_check
          %p1284 = pneg %p239
        $region86: #{tpu_custom_call.1} parent=43 // pred_check_branch
          %1286 = sbr.rel (%p1284) target = $region88
        $region87: #{tpu_custom_call.1} parent=43 // pred_region
          %1287 = dma.done [#allocation14], 128
        $region88: #{tpu_custom_call.1} parent=43 // pred_fallthru
          _
      $region44: #{tpu_custom_call.1} parent=5 // pred_fallthru
        _
      %p1288 = scmp.le.s32.totalorder 2, %s22
      // Predicated region
      $region89: #{tpu_custom_call.1} parent=5 // pred_check
        %p1289 = pneg %p1288
      $region90: #{tpu_custom_call.1} parent=5 // pred_check_branch
        %1291 = sbr.rel (%p1289) target = $region92
      $region91: #{tpu_custom_call.1} parent=5 // pred_region
        %s1292 = ssub.s32 %s22, 2
      $region92: #{tpu_custom_call.1} parent=5 // pred_fallthru
        _
    $region6: #{tpu_custom_call.1} parent=1 // loop_footer
      %s26 = sadd.s32 1, %s22
    $region7: #{tpu_custom_call.1} parent=1 // loop_footer_branch
      %21 = sbr.rel target = $region3
    $region8: #{tpu_custom_call.1} parent=1 // loop_exit
      _
    %1293 = vsyncpa [#allocation7], 1
    %s1294 = scalar_lea.sflag [#allocation7], 1
    %1295 = vsyncpa %s1294, 1
    %1296 = vsyncpa [#allocation8], 1
    %s1297 = scalar_lea.sflag [#allocation8], 1
    %1298 = vsyncpa %s1297, 1
    %1299 = vsyncpa [#allocation11], 1
    %1300 = vsyncpa [#allocation14], 1

</llo_original>
